<compile_context>
chip_gen: v5e
topology: v5e:2x2
jax: 0.10.0
libtpu: 0.0.40
codegen_flags: <defaults>
</compile_context>

<pallas_src>
import functools

import numpy as np
import jax
import jax.numpy as jnp
from jax.experimental import pallas as pl
from jax.experimental.pallas import tpu as pltpu

# ----------------------------- configuration --------------------------------
NUM_CLASSES = 2                      # RPN: background + foreground
ANCHOR_RATIOS = [0.5, 1.0, 2.0]
ANCHOR_SCALES = [8.0]
NUM_ANCHORS = len(ANCHOR_RATIOS) * len(ANCHOR_SCALES)   # A = 3
FEAT_PLANES = 32                     # hidden channels of the 3x3 conv
NUM_FIELDS = 5                       # kernel emits (x1, y1, x2, y2, score)
DELTA_CLAMP = float(np.log(1000.0 / 16.0))   # dw/dh clamp before exp


def _round_up(v, m):
    return ((v + m - 1) // m) * m


# ----------------------------- Pallas kernel ---------------------------------
def _roi_level_kernel(xpad_ref, w3_ref, b3_ref, wh_ref, bh_ref, anc_ref, info_ref,
                      out_ref, *, stride, wp, nc):
    """Fused conv3x3 + ReLU + cls|loc head + sigmoid + bbox decode for one image.

    Layout: everything channel-major, the (zero-padded, flattened) spatial index
    q = y*wp + x sits on the 128-lane axis.  Statics: stride, wp (=W+2), nc
    (=compute lane width, multiple of 128).
    """
    b = pl.program_id(0)
    cmid = w3_ref.shape[1]
    A = anc_ref.shape[0]

    # ---- stage 1: 3x3 conv as 9 shifted-window matmul-accumulates (in-kernel
    #      im2col).  Window s = dy*wp + dx reads xpad[q + s], which for a valid
    #      output pixel (y < H, x < W) is exactly the conv tap (y+dy-1, x+dx-1).
    acc = jnp.zeros((cmid, nc), jnp.float32)
    for dy in range(3):
        for dx in range(3):
            s = dy * wp + dx
            win = xpad_ref[0, :, s:s + nc]                        # (Cin, nc) f32
            acc = acc + jnp.dot(w3_ref[dy * 3 + dx], win,
                                preferred_element_type=jnp.float32)
    feat = jnp.maximum(acc + b3_ref[...], 0.0)                    # (Cmid, nc) ReLU

    # ---- stage 2: cls + loc 1x1 convs fused into one matmul, field-major rows --
    head = jnp.dot(wh_ref[...], feat,
                   preferred_element_type=jnp.float32) + bh_ref[...]   # (6A, nc)

    c0 = head[0 * A:1 * A]                                        # (A, nc) each
    c1 = head[1 * A:2 * A]
    tx = head[2 * A:3 * A]
    ty = head[3 * A:4 * A]
    tw = jnp.minimum(head[4 * A:5 * A], DELTA_CLAMP)
    th = jnp.minimum(head[5 * A:6 * A], DELTA_CLAMP)

    # 2-class softmax foreground prob == sigmoid(c1 - c0): EUP exp + reciprocal.
    score = pl.reciprocal(1.0 + jnp.exp(c0 - c1), approx=True)    # (A, nc)

    # ---- stage 3: in-kernel anchor generation from a lane iota -----------------
    # q -> (row, col) of the padded grid; float divide-by-constant with an exact
    # one-step fixup (no integer division needed on the VPU).
    q = jax.lax.broadcasted_iota(jnp.int32, (A, nc), 1).astype(jnp.float32)
    y0 = jnp.floor(q * (1.0 / wp))
    xr = q - y0 * wp
    yq = jnp.where(xr >= wp, y0 + 1.0, jnp.where(xr < 0.0, y0 - 1.0, y0))
    xq = q - yq * wp                                              # exact column idx

    anc = anc_ref[...]                                            # (A,4)=[ocx,ocy,aw,ah]
    acx = anc[:, 0:1] + xq * stride
    acy = anc[:, 1:2] + yq * stride
    aw = anc[:, 2:3]
    ah = anc[:, 3:4]

    pcx = tx * aw + acx
    pcy = ty * ah + acy
    pw = jnp.exp(tw) * aw
    ph = jnp.exp(th) * ah

    img_h = info_ref[b, 0]
    img_w = info_ref[b, 1]

    # ---- stage 4: field-major, lane-dense stores (no per-anchor concat) --------
    out_ref[0, 0, :, :] = jnp.clip(pcx - 0.5 * pw, 0.0, img_w - 1.0)
    out_ref[0, 1, :, :] = jnp.clip(pcy - 0.5 * ph, 0.0, img_h - 1.0)
    out_ref[0, 2, :, :] = jnp.clip(pcx + 0.5 * pw - 1.0, 0.0, img_w - 1.0)
    out_ref[0, 3, :, :] = jnp.clip(pcy + 0.5 * ph - 1.0, 0.0, img_h - 1.0)
    out_ref[0, 4, :, :] = score


def roi_fused_level(xpad, w3_k, b3_k, wh, bh, anc, image_info, *, stride, wp, nc):
    """xpad [B, Cin, NL] f32 (padded-flat plane) -> rois slab [B, 5, A, nc] f32."""
    B, Cin, NL = xpad.shape
    Cmid = w3_k.shape[1]
    NH = wh.shape[0]
    A = anc.shape[0]

    kernel = functools.partial(_roi_level_kernel,
                               stride=float(stride), wp=int(wp), nc=int(nc))

    cost = pl.CostEstimate(
        flops=int(B * nc * (2 * 9 * Cmid * Cin + 2 * NH * Cmid + 40 * A)),
        transcendentals=int(4 * B * A * nc),
        bytes_accessed=int(xpad.size * 4 + B * NUM_FIELDS * A * nc * 4 +
                           (w3_k.size + b3_k.size + wh.size + bh.size +
                            anc.size + image_info.size) * 4),
    )

    return pl.pallas_call(
        kernel,
        out_shape=jax.ShapeDtypeStruct((B, NUM_FIELDS, A, nc), jnp.float32),
        grid=(B,),
        in_specs=[
            pl.BlockSpec((1, Cin, NL), lambda b: (b, 0, 0)),       # padded plane
            pl.BlockSpec((9, Cmid, Cin), lambda b: (0, 0, 0)),     # 3x3 conv weight
            pl.BlockSpec((Cmid, 1), lambda b: (0, 0)),             # 3x3 conv bias
            pl.BlockSpec((NH, Cmid), lambda b: (0, 0)),            # fused cls|loc W
            pl.BlockSpec((NH, 1), lambda b: (0, 0)),               # fused cls|loc b
            pl.BlockSpec((A, 4), lambda b: (0, 0)),                # anchor constants
            pl.BlockSpec(memory_space=pltpu.MemorySpace.SMEM),     # image_info
        ],
        out_specs=pl.BlockSpec((1, NUM_FIELDS, A, nc), lambda b: (b, 0, 0, 0)),
        compiler_params=pltpu.CompilerParams(
            dimension_semantics=("parallel",)),
        cost_estimate=cost,
    )(xpad, w3_k, b3_k, wh, bh, anc, image_info)


# ----------------------------- anchor generation (glue) ----------------------
def get_anchors_over_grid(ratios, scales, base_size):
    base = np.array([0.0, 0.0, base_size - 1.0, base_size - 1.0], dtype=np.float64)
    w = base[2] - base[0] + 1.0
    h = base[3] - base[1] + 1.0
    x_ctr = base[0] + 0.5 * (w - 1.0)
    y_ctr = base[1] + 0.5 * (h - 1.0)
    size = w * h
    anchors = []
    for r in ratios:
        ws = np.round(np.sqrt(size / r))
        hs = np.round(ws * r)
        for s in scales:
            ws_s = ws * s
            hs_s = hs * s
            anchors.append([x_ctr - 0.5 * (ws_s - 1.0),
                            y_ctr - 0.5 * (hs_s - 1.0),
                            x_ctr + 0.5 * (ws_s - 1.0),
                            y_ctr + 0.5 * (hs_s - 1.0)])
    return np.array(anchors, dtype=np.float32)                    # [A, 4]


def _anchor_constants(stride):
    """Per-anchor constants [ocx, ocy, aw, ah] (legacy +1 convention): the anchor
    center at pixel (y, x) is (ocx + x*stride, ocy + y*stride)."""
    base = get_anchors_over_grid(ANCHOR_RATIOS, ANCHOR_SCALES, stride)   # (A, 4)
    aw = base[:, 2] - base[:, 0] + 1.0
    ah = base[:, 3] - base[:, 1] + 1.0
    ocx = base[:, 0] + 0.5 * aw
    ocy = base[:, 1] + 0.5 * ah
    return jnp.asarray(np.stack([ocx, ocy, aw, ah], axis=1), dtype=jnp.float32)


# ----------------------------- forward (glue + kernel) -----------------------
def roinet_forward(params, inputs):
    assert NUM_CLASSES == 2
    features = inputs['features']                  # list of NCHW [B, Cin, H, W]
    strides = inputs['strides']
    image_info = inputs['image_info'].astype(jnp.float32)          # [B, 5]

    w3, b3, wc, bc, wl, bl = params                # PyTorch conv layouts
    Cmid = w3.shape[0]
    A, C = NUM_ANCHORS, NUM_CLASSES

    # 3x3 conv weight [Cmid, Cin, 3, 3] -> (9, Cmid, Cin), row j = dy*3 + dx.
    w3_k = jnp.transpose(w3, (2, 3, 0, 1)).reshape(9, Cmid, w3.shape[1])
    b3_k = b3.reshape(Cmid, 1)

    # Fused cls|loc 1x1 head with FIELD-MAJOR row order (all c0 | c1 | tx | ty |
    # tw | th), a free host-side permutation of the PyTorch (anchor-major,
    # class/coord-minor) output channels used by repermute_preds.
    cls_order = np.array([a * C + c for c in range(C) for a in range(A)])
    loc_order = np.array([a * 4 + f for f in range(4) for a in range(A)])
    wh = jnp.concatenate([wc.reshape(A * C, Cmid)[cls_order],
                          wl.reshape(A * 4, Cmid)[loc_order]], axis=0)   # (6A, Cmid)
    bh = jnp.concatenate([bc[cls_order], bl[loc_order]]).reshape(-1, 1)  # (6A, 1)

    mlvl_rois = []
    B = features[0].shape[0]
    for x, stride in zip(features, strides):
        _, Cin, H, W = x.shape
        Hp, Wp = H + 2, W + 2
        NC = _round_up(H * Wp, 128)                         # compute lane width
        NL = _round_up(max(NC + 2 * Wp + 2, Hp * Wp), 128)  # padded-flat input width

        # Zero-pad (the conv's padding=1) and flatten the plane; lanes beyond the
        # real plane are zero and only feed lanes that the wrapper slices away.
        xp = jnp.pad(x, ((0, 0), (0, 0), (1, 1), (1, 1))).reshape(B, Cin, Hp * Wp)
        xp = jnp.pad(xp, ((0, 0), (0, 0), (0, NL - Hp * Wp))).astype(jnp.float32)

        anc = _anchor_constants(stride)                     # (A, 4)

        rois_t = roi_fused_level(xp, w3_k, b3_k, wh, bh, anc, image_info,
                                 stride=stride, wp=Wp, nc=NC)   # (B, 5, A, NC)

        # padded-flat lanes -> valid H x W grid, then reference [B, h*w*A, :] order
        r = rois_t[..., :H * Wp].reshape(B, NUM_FIELDS, A, H, Wp)[..., :W]
        r = r.transpose(0, 3, 4, 2, 1).reshape(B, H * W * A, NUM_FIELDS)
        bcol = jnp.broadcast_to(jnp.arange(B, dtype=jnp.float32)[:, None, None],
                                (B, H * W * A, 1))
        ccol = jnp.ones((B, H * W * A, 1), jnp.float32)     # fg class id = 1
        mlvl_rois.append(jnp.concatenate([bcol, r, ccol], axis=-1))     # (B, K, 7)

    # merge_mlvl_rois (nms_iou_thresh <= 0, top_n <= 0): group rois per image.
    merged = jnp.concatenate(mlvl_rois, axis=1).reshape(-1, 7)
    return {'dt_bboxes': merged}


# ----------------------------- pure-JAX reference ----------------------------
def _reference_level_rois(x, stride, w3, b3, wc, bc, wl, bl, image_info):
    B, _, H, W = x.shape
    A, C = NUM_ANCHORS, NUM_CLASSES
    dn = ('NCHW', 'OIHW', 'NCHW')
    feat = jax.lax.conv_general_dilated(x, w3, (1, 1), 'SAME', dimension_numbers=dn)
    feat = jnp.maximum(feat + b3[None, :, None, None], 0.0)
    cls = jax.lax.conv_general_dilated(feat, wc, (1, 1), 'SAME',
                                       dimension_numbers=dn) + bc[None, :, None, None]
    loc = jax.lax.conv_general_dilated(feat, wl, (1, 1), 'SAME',
                                       dimension_numbers=dn) + bl[None, :, None, None]
    K = H * W * A
    clsk = cls.transpose(0, 2, 3, 1).reshape(B, K, C)
    lock = loc.transpose(0, 2, 3, 1).reshape(B, K, 4)
    score = jax.nn.softmax(clsk, axis=-1)[..., 1]

    base = get_anchors_over_grid(ANCHOR_RATIOS, ANCHOR_SCALES, stride)
    sx = np.arange(W, dtype=np.float32) * stride
    sy = np.arange(H, dtype=np.float32) * stride
    gx, gy = np.meshgrid(sx, sy)
    shifts = np.stack([gx.ravel(), gy.ravel(), gx.ravel(), gy.ravel()], axis=1)
    anchors = jnp.asarray((shifts[:, None, :] + base[None, :, :]).reshape(K, 4))

    aw = anchors[:, 2] - anchors[:, 0] + 1.0
    ah = anchors[:, 3] - anchors[:, 1] + 1.0
    acx = anchors[:, 0] + 0.5 * aw
    acy = anchors[:, 1] + 0.5 * ah
    tx, ty = lock[..., 0], lock[..., 1]
    tw = jnp.minimum(lock[..., 2], DELTA_CLAMP)
    th = jnp.minimum(lock[..., 3], DELTA_CLAMP)
    pcx = tx * aw + acx
    pcy = ty * ah + acy
    pw = jnp.exp(tw) * aw
    ph = jnp.exp(th) * ah
    img_h = image_info[:, 0:1]
    img_w = image_info[:, 1:2]
    x1 = jnp.clip(pcx - 0.5 * pw, 0.0, img_w - 1.0)
    y1 = jnp.clip(pcy - 0.5 * ph, 0.0, img_h - 1.0)
    x2 = jnp.clip(pcx + 0.5 * pw - 1.0, 0.0, img_w - 1.0)
    y2 = jnp.clip(pcy + 0.5 * ph - 1.0, 0.0, img_h - 1.0)
    bcol = jnp.broadcast_to(jnp.arange(B, dtype=jnp.float32)[:, None], (B, K))
    ccol = jnp.ones((B, K), jnp.float32)
    return jnp.stack([bcol, x1, y1, x2, y2, score, ccol], axis=-1)


def roinet_reference(params, inputs):
    w3, b3, wc, bc, wl, bl = params
    info = inputs['image_info'].astype(jnp.float32)
    mlvl = [_reference_level_rois(x, s, w3, b3, wc, bc, wl, bl, info)
            for x, s in zip(inputs['features'], inputs['strides'])]
    return jnp.concatenate(mlvl, axis=1).reshape(-1, 7)


# ----------------------------- main -------------------------------------------
if __name__ == "__main__":
    B, Cin = 2, 4
    strides = [8, 16]
    spatial = [(16, 16), (8, 8)]
    A, C = NUM_ANCHORS, NUM_CLASSES

    key = jax.random.PRNGKey(0)
    k = jax.random.split(key, 8)

    # Deterministic synthetic parameters in standard PyTorch conv layouts.
    w3 = 0.1 * jax.random.normal(k[0], (FEAT_PLANES, Cin, 3, 3), jnp.float32)
    b3 = 0.01 * jax.random.normal(k[1], (FEAT_PLANES,), jnp.float32)
    wc = 0.1 * jax.random.normal(k[2], (A * C, FEAT_PLANES, 1, 1), jnp.float32)
    bc = 0.01 * jax.random.normal(k[3], (A * C,), jnp.float32)
    wl = 0.1 * jax.random.normal(k[4], (A * 4, FEAT_PLANES, 1, 1), jnp.float32)
    bl = 0.01 * jax.random.normal(k[5], (A * 4,), jnp.float32)
    params = (w3, b3, wc, bc, wl, bl)

    features = [
        jax.random.normal(k[6], (B, Cin, spatial[0][0], spatial[0][1]), jnp.float32),
        jax.random.normal(k[7], (B, Cin, spatial[1][0], spatial[1][1]), jnp.float32),
    ]
    # (resized_h, resized_w, scale, origin_h, origin_w)
    image_info = jnp.array([[128.0, 128.0, 1.0, 128.0, 128.0],
                            [128.0, 120.0, 1.0, 128.0, 120.0]], dtype=jnp.float32)

    inputs = {'features': features, 'strides': strides, 'image_info': image_info}

    out = roinet_forward(params, inputs)
    rois = jax.block_until_ready(out['dt_bboxes'])

    expected_rows = B * sum(h * w * A for (h, w) in spatial)
    assert rois.shape == (expected_rows, 7), rois.shape
    assert bool(jnp.all(jnp.isfinite(rois)))
    assert bool(jnp.all((rois[:, 0] >= 0) & (rois[:, 0] <= B - 1)))
    assert bool(jnp.all((rois[:, 5] >= 0.0) & (rois[:, 5] <= 1.0 + 1e-3)))

    # Cross-check against a pure-JAX (lax.conv) implementation of the same path.
    ref = jax.block_until_ready(roinet_reference(params, inputs))
    np.testing.assert_allclose(np.asarray(rois), np.asarray(ref), rtol=0, atol=3e-2)

    print("KERNEL_OK")
</pallas_src>

<mosaic_0001>
module attributes {stable_mosaic.version = 11 : i64} {
  func.func @_roi_level_kernel(%arg0: i32, %arg1: memref<1x4x512xf32, #tpu.memory_space<vmem>>, %arg2: memref<9x32x4xf32, #tpu.memory_space<vmem>>, %arg3: memref<32x1xf32, #tpu.memory_space<vmem>>, %arg4: memref<18x32xf32, #tpu.memory_space<vmem>>, %arg5: memref<18x1xf32, #tpu.memory_space<vmem>>, %arg6: memref<3x4xf32, #tpu.memory_space<vmem>>, %arg7: memref<2x5xf32, #tpu.memory_space<smem>>, %arg8: memref<1x5x3x384xf32, #tpu.memory_space<vmem>>) attributes {dimension_semantics = [#tpu.dimension_semantics<parallel>], iteration_bounds = array<i64: 2>, scalar_prefetch = 0 : i64, scratch_operands = 0 : i64, tpu.core_type = #tpu.core_type<tc>, window_params = [{transform_indices = @transform_0, window_bounds = array<i64: 1, 4, 512>}, {pipeline_mode = #tpu.pipeline_mode<synchronous>, transform_indices = @transform_1, window_bounds = array<i64: 9, 32, 4>}, {pipeline_mode = #tpu.pipeline_mode<synchronous>, transform_indices = @transform_2, window_bounds = array<i64: 32, 1>}, {pipeline_mode = #tpu.pipeline_mode<synchronous>, transform_indices = @transform_3, window_bounds = array<i64: 18, 32>}, {pipeline_mode = #tpu.pipeline_mode<synchronous>, transform_indices = @transform_4, window_bounds = array<i64: 18, 1>}, {pipeline_mode = #tpu.pipeline_mode<synchronous>, transform_indices = @transform_5, window_bounds = array<i64: 3, 4>}, {transform_indices = @transform_6, window_bounds = array<i64: 2, 5>}, {transform_indices = @transform_7, window_bounds = array<i64: 1, 5, 3, 384>}]} {
    %cst = arith.constant 0.000000e+00 : f32
    %0 = vector.broadcast %cst : f32 to vector<32x384xf32>
    %c0 = arith.constant 0 : index
    %c0_0 = arith.constant 0 : index
    %c0_1 = arith.constant 0 : index
    %1 = vector.load %arg1[%c0, %c0_0, %c0_1] : memref<1x4x512xf32, #tpu.memory_space<vmem>>, vector<1x4x384xf32>
    %2 = vector.shape_cast %1 : vector<1x4x384xf32> to vector<4x384xf32>
    %c0_2 = arith.constant 0 : index
    %c0_3 = arith.constant 0 : index
    %c0_4 = arith.constant 0 : index
    %3 = vector.load %arg2[%c0_2, %c0_3, %c0_4] : memref<9x32x4xf32, #tpu.memory_space<vmem>>, vector<1x32x4xf32>
    %4 = vector.shape_cast %3 : vector<1x32x4xf32> to vector<32x4xf32>
    %cst_5 = arith.constant dense<0.000000e+00> : vector<32x384xf32>
    %5 = tpu.matmul %4, %2, %cst_5 {dimension_numbers = #tpu.dot_dimension_numbers<[1], [0], [0], [1], [0, 0, 1, 1], [], []>} : vector<32x4xf32>, vector<4x384xf32>, vector<32x384xf32> -> vector<32x384xf32>
    %6 = arith.addf %0, %5 : vector<32x384xf32>
    %c0_6 = arith.constant 0 : index
    %c0_7 = arith.constant 0 : index
    %c1 = arith.constant 1 : index
    %7 = vector.load %arg1[%c0_6, %c0_7, %c1] : memref<1x4x512xf32, #tpu.memory_space<vmem>>, vector<1x4x384xf32>
    %8 = vector.shape_cast %7 : vector<1x4x384xf32> to vector<4x384xf32>
    %c1_8 = arith.constant 1 : index
    %c0_9 = arith.constant 0 : index
    %c0_10 = arith.constant 0 : index
    %9 = vector.load %arg2[%c1_8, %c0_9, %c0_10] : memref<9x32x4xf32, #tpu.memory_space<vmem>>, vector<1x32x4xf32>
    %10 = vector.shape_cast %9 : vector<1x32x4xf32> to vector<32x4xf32>
    %cst_11 = arith.constant dense<0.000000e+00> : vector<32x384xf32>
    %11 = tpu.matmul %10, %8, %cst_11 {dimension_numbers = #tpu.dot_dimension_numbers<[1], [0], [0], [1], [0, 0, 1, 1], [], []>} : vector<32x4xf32>, vector<4x384xf32>, vector<32x384xf32> -> vector<32x384xf32>
    %12 = arith.addf %6, %11 : vector<32x384xf32>
    %c0_12 = arith.constant 0 : index
    %c0_13 = arith.constant 0 : index
    %c2 = arith.constant 2 : index
    %13 = vector.load %arg1[%c0_12, %c0_13, %c2] : memref<1x4x512xf32, #tpu.memory_space<vmem>>, vector<1x4x384xf32>
    %14 = vector.shape_cast %13 : vector<1x4x384xf32> to vector<4x384xf32>
    %c2_14 = arith.constant 2 : index
    %c0_15 = arith.constant 0 : index
    %c0_16 = arith.constant 0 : index
    %15 = vector.load %arg2[%c2_14, %c0_15, %c0_16] : memref<9x32x4xf32, #tpu.memory_space<vmem>>, vector<1x32x4xf32>
    %16 = vector.shape_cast %15 : vector<1x32x4xf32> to vector<32x4xf32>
    %cst_17 = arith.constant dense<0.000000e+00> : vector<32x384xf32>
    %17 = tpu.matmul %16, %14, %cst_17 {dimension_numbers = #tpu.dot_dimension_numbers<[1], [0], [0], [1], [0, 0, 1, 1], [], []>} : vector<32x4xf32>, vector<4x384xf32>, vector<32x384xf32> -> vector<32x384xf32>
    %18 = arith.addf %12, %17 : vector<32x384xf32>
    %c0_18 = arith.constant 0 : index
    %c0_19 = arith.constant 0 : index
    %c18 = arith.constant 18 : index
    %19 = vector.load %arg1[%c0_18, %c0_19, %c18] : memref<1x4x512xf32, #tpu.memory_space<vmem>>, vector<1x4x384xf32>
    %20 = vector.shape_cast %19 : vector<1x4x384xf32> to vector<4x384xf32>
    %c3 = arith.constant 3 : index
    %c0_20 = arith.constant 0 : index
    %c0_21 = arith.constant 0 : index
    %21 = vector.load %arg2[%c3, %c0_20, %c0_21] : memref<9x32x4xf32, #tpu.memory_space<vmem>>, vector<1x32x4xf32>
    %22 = vector.shape_cast %21 : vector<1x32x4xf32> to vector<32x4xf32>
    %cst_22 = arith.constant dense<0.000000e+00> : vector<32x384xf32>
    %23 = tpu.matmul %22, %20, %cst_22 {dimension_numbers = #tpu.dot_dimension_numbers<[1], [0], [0], [1], [0, 0, 1, 1], [], []>} : vector<32x4xf32>, vector<4x384xf32>, vector<32x384xf32> -> vector<32x384xf32>
    %24 = arith.addf %18, %23 : vector<32x384xf32>
    %c0_23 = arith.constant 0 : index
    %c0_24 = arith.constant 0 : index
    %c19 = arith.constant 19 : index
    %25 = vector.load %arg1[%c0_23, %c0_24, %c19] : memref<1x4x512xf32, #tpu.memory_space<vmem>>, vector<1x4x384xf32>
    %26 = vector.shape_cast %25 : vector<1x4x384xf32> to vector<4x384xf32>
    %c4 = arith.constant 4 : index
    %c0_25 = arith.constant 0 : index
    %c0_26 = arith.constant 0 : index
    %27 = vector.load %arg2[%c4, %c0_25, %c0_26] : memref<9x32x4xf32, #tpu.memory_space<vmem>>, vector<1x32x4xf32>
    %28 = vector.shape_cast %27 : vector<1x32x4xf32> to vector<32x4xf32>
    %cst_27 = arith.constant dense<0.000000e+00> : vector<32x384xf32>
    %29 = tpu.matmul %28, %26, %cst_27 {dimension_numbers = #tpu.dot_dimension_numbers<[1], [0], [0], [1], [0, 0, 1, 1], [], []>} : vector<32x4xf32>, vector<4x384xf32>, vector<32x384xf32> -> vector<32x384xf32>
    %30 = arith.addf %24, %29 : vector<32x384xf32>
    %c0_28 = arith.constant 0 : index
    %c0_29 = arith.constant 0 : index
    %c20 = arith.constant 20 : index
    %31 = vector.load %arg1[%c0_28, %c0_29, %c20] : memref<1x4x512xf32, #tpu.memory_space<vmem>>, vector<1x4x384xf32>
    %32 = vector.shape_cast %31 : vector<1x4x384xf32> to vector<4x384xf32>
    %c5 = arith.constant 5 : index
    %c0_30 = arith.constant 0 : index
    %c0_31 = arith.constant 0 : index
    %33 = vector.load %arg2[%c5, %c0_30, %c0_31] : memref<9x32x4xf32, #tpu.memory_space<vmem>>, vector<1x32x4xf32>
    %34 = vector.shape_cast %33 : vector<1x32x4xf32> to vector<32x4xf32>
    %cst_32 = arith.constant dense<0.000000e+00> : vector<32x384xf32>
    %35 = tpu.matmul %34, %32, %cst_32 {dimension_numbers = #tpu.dot_dimension_numbers<[1], [0], [0], [1], [0, 0, 1, 1], [], []>} : vector<32x4xf32>, vector<4x384xf32>, vector<32x384xf32> -> vector<32x384xf32>
    %36 = arith.addf %30, %35 : vector<32x384xf32>
    %c0_33 = arith.constant 0 : index
    %c0_34 = arith.constant 0 : index
    %c36 = arith.constant 36 : index
    %37 = vector.load %arg1[%c0_33, %c0_34, %c36] : memref<1x4x512xf32, #tpu.memory_space<vmem>>, vector<1x4x384xf32>
    %38 = vector.shape_cast %37 : vector<1x4x384xf32> to vector<4x384xf32>
    %c6 = arith.constant 6 : index
    %c0_35 = arith.constant 0 : index
    %c0_36 = arith.constant 0 : index
    %39 = vector.load %arg2[%c6, %c0_35, %c0_36] : memref<9x32x4xf32, #tpu.memory_space<vmem>>, vector<1x32x4xf32>
    %40 = vector.shape_cast %39 : vector<1x32x4xf32> to vector<32x4xf32>
    %cst_37 = arith.constant dense<0.000000e+00> : vector<32x384xf32>
    %41 = tpu.matmul %40, %38, %cst_37 {dimension_numbers = #tpu.dot_dimension_numbers<[1], [0], [0], [1], [0, 0, 1, 1], [], []>} : vector<32x4xf32>, vector<4x384xf32>, vector<32x384xf32> -> vector<32x384xf32>
    %42 = arith.addf %36, %41 : vector<32x384xf32>
    %c0_38 = arith.constant 0 : index
    %c0_39 = arith.constant 0 : index
    %c37 = arith.constant 37 : index
    %43 = vector.load %arg1[%c0_38, %c0_39, %c37] : memref<1x4x512xf32, #tpu.memory_space<vmem>>, vector<1x4x384xf32>
    %44 = vector.shape_cast %43 : vector<1x4x384xf32> to vector<4x384xf32>
    %c7 = arith.constant 7 : index
    %c0_40 = arith.constant 0 : index
    %c0_41 = arith.constant 0 : index
    %45 = vector.load %arg2[%c7, %c0_40, %c0_41] : memref<9x32x4xf32, #tpu.memory_space<vmem>>, vector<1x32x4xf32>
    %46 = vector.shape_cast %45 : vector<1x32x4xf32> to vector<32x4xf32>
    %cst_42 = arith.constant dense<0.000000e+00> : vector<32x384xf32>
    %47 = tpu.matmul %46, %44, %cst_42 {dimension_numbers = #tpu.dot_dimension_numbers<[1], [0], [0], [1], [0, 0, 1, 1], [], []>} : vector<32x4xf32>, vector<4x384xf32>, vector<32x384xf32> -> vector<32x384xf32>
    %48 = arith.addf %42, %47 : vector<32x384xf32>
    %c0_43 = arith.constant 0 : index
    %c0_44 = arith.constant 0 : index
    %c38 = arith.constant 38 : index
    %49 = vector.load %arg1[%c0_43, %c0_44, %c38] : memref<1x4x512xf32, #tpu.memory_space<vmem>>, vector<1x4x384xf32>
    %50 = vector.shape_cast %49 : vector<1x4x384xf32> to vector<4x384xf32>
    %c8 = arith.constant 8 : index
    %c0_45 = arith.constant 0 : index
    %c0_46 = arith.constant 0 : index
    %51 = vector.load %arg2[%c8, %c0_45, %c0_46] : memref<9x32x4xf32, #tpu.memory_space<vmem>>, vector<1x32x4xf32>
    %52 = vector.shape_cast %51 : vector<1x32x4xf32> to vector<32x4xf32>
    %cst_47 = arith.constant dense<0.000000e+00> : vector<32x384xf32>
    %53 = tpu.matmul %52, %50, %cst_47 {dimension_numbers = #tpu.dot_dimension_numbers<[1], [0], [0], [1], [0, 0, 1, 1], [], []>} : vector<32x4xf32>, vector<4x384xf32>, vector<32x384xf32> -> vector<32x384xf32>
    %54 = arith.addf %48, %53 : vector<32x384xf32>
    %c0_48 = arith.constant 0 : index
    %c0_49 = arith.constant 0 : index
    %55 = vector.load %arg3[%c0_48, %c0_49] : memref<32x1xf32, #tpu.memory_space<vmem>>, vector<32x1xf32>
    %56 = vector.broadcast %55 : vector<32x1xf32> to vector<32x384xf32>
    %57 = arith.addf %54, %56 : vector<32x384xf32>
    %cst_50 = arith.constant 0.000000e+00 : f32
    %58 = vector.broadcast %cst_50 : f32 to vector<32x384xf32>
    %59 = arith.maximumf %57, %58 : vector<32x384xf32>
    %c0_51 = arith.constant 0 : index
    %c0_52 = arith.constant 0 : index
    %60 = vector.load %arg4[%c0_51, %c0_52] : memref<18x32xf32, #tpu.memory_space<vmem>>, vector<18x32xf32>
    %cst_53 = arith.constant dense<0.000000e+00> : vector<18x384xf32>
    %61 = tpu.matmul %60, %59, %cst_53 {dimension_numbers = #tpu.dot_dimension_numbers<[1], [0], [0], [1], [0, 0, 1, 1], [], []>} : vector<18x32xf32>, vector<32x384xf32>, vector<18x384xf32> -> vector<18x384xf32>
    %c0_54 = arith.constant 0 : index
    %c0_55 = arith.constant 0 : index
    %62 = vector.load %arg5[%c0_54, %c0_55] : memref<18x1xf32, #tpu.memory_space<vmem>>, vector<18x1xf32>
    %63 = vector.broadcast %62 : vector<18x1xf32> to vector<18x384xf32>
    %64 = arith.addf %61, %63 : vector<18x384xf32>
    %65 = vector.extract_strided_slice %64 {offsets = [0, 0], sizes = [3, 384], strides = [1, 1]} : vector<18x384xf32> to vector<3x384xf32>
    %66 = vector.extract_strided_slice %64 {offsets = [3, 0], sizes = [3, 384], strides = [1, 1]} : vector<18x384xf32> to vector<3x384xf32>
    %67 = vector.extract_strided_slice %64 {offsets = [6, 0], sizes = [3, 384], strides = [1, 1]} : vector<18x384xf32> to vector<3x384xf32>
    %68 = vector.extract_strided_slice %64 {offsets = [9, 0], sizes = [3, 384], strides = [1, 1]} : vector<18x384xf32> to vector<3x384xf32>
    %69 = vector.extract_strided_slice %64 {offsets = [12, 0], sizes = [3, 384], strides = [1, 1]} : vector<18x384xf32> to vector<3x384xf32>
    %cst_56 = arith.constant 4.13516665 : f32
    %70 = vector.broadcast %cst_56 : f32 to vector<3x384xf32>
    %71 = arith.minimumf %69, %70 : vector<3x384xf32>
    %72 = vector.extract_strided_slice %64 {offsets = [15, 0], sizes = [3, 384], strides = [1, 1]} : vector<18x384xf32> to vector<3x384xf32>
    %cst_57 = arith.constant 4.13516665 : f32
    %73 = vector.broadcast %cst_57 : f32 to vector<3x384xf32>
    %74 = arith.minimumf %72, %73 : vector<3x384xf32>
    %75 = arith.subf %65, %66 : vector<3x384xf32>
    %76 = math.exp %75 : vector<3x384xf32>
    %cst_58 = arith.constant 1.000000e+00 : f32
    %77 = vector.broadcast %cst_58 : f32 to vector<3x384xf32>
    %78 = arith.addf %77, %76 : vector<3x384xf32>
    %79 = tpu.reciprocal %78 {approx = true} : vector<3x384xf32> -> vector<3x384xf32>
    %80 = tpu.iota {dimensions = array<i32: 1>} : vector<3x384xi32>
    %81 = arith.sitofp %80 : vector<3x384xi32> to vector<3x384xf32>
    %cst_59 = arith.constant 0.055555556 : f32
    %82 = vector.broadcast %cst_59 : f32 to vector<3x384xf32>
    %83 = arith.mulf %81, %82 : vector<3x384xf32>
    %84 = math.floor %83 : vector<3x384xf32>
    %cst_60 = arith.constant 1.800000e+01 : f32
    %85 = vector.broadcast %cst_60 : f32 to vector<3x384xf32>
    %86 = arith.mulf %84, %85 : vector<3x384xf32>
    %87 = arith.subf %81, %86 : vector<3x384xf32>
    %cst_61 = arith.constant 1.800000e+01 : f32
    %88 = vector.broadcast %cst_61 : f32 to vector<3x384xf32>
    %89 = arith.cmpf oge, %87, %88 : vector<3x384xf32>
    %cst_62 = arith.constant 1.000000e+00 : f32
    %90 = vector.broadcast %cst_62 : f32 to vector<3x384xf32>
    %91 = arith.addf %84, %90 : vector<3x384xf32>
    %cst_63 = arith.constant 0.000000e+00 : f32
    %92 = vector.broadcast %cst_63 : f32 to vector<3x384xf32>
    %93 = arith.cmpf olt, %87, %92 : vector<3x384xf32>
    %cst_64 = arith.constant 1.000000e+00 : f32
    %94 = vector.broadcast %cst_64 : f32 to vector<3x384xf32>
    %95 = arith.subf %84, %94 : vector<3x384xf32>
    %96 = arith.select %93, %95, %84 : vector<3x384xi1>, vector<3x384xf32>
    %97 = arith.select %89, %91, %96 : vector<3x384xi1>, vector<3x384xf32>
    %cst_65 = arith.constant 1.800000e+01 : f32
    %98 = vector.broadcast %cst_65 : f32 to vector<3x384xf32>
    %99 = arith.mulf %97, %98 : vector<3x384xf32>
    %100 = arith.subf %81, %99 : vector<3x384xf32>
    %c0_66 = arith.constant 0 : index
    %c0_67 = arith.constant 0 : index
    %101 = vector.load %arg6[%c0_66, %c0_67] : memref<3x4xf32, #tpu.memory_space<vmem>>, vector<3x4xf32>
    %102 = vector.extract_strided_slice %101 {offsets = [0, 0], sizes = [3, 1], strides = [1, 1]} : vector<3x4xf32> to vector<3x1xf32>
    %cst_68 = arith.constant 8.000000e+00 : f32
    %103 = vector.broadcast %cst_68 : f32 to vector<3x384xf32>
    %104 = arith.mulf %100, %103 : vector<3x384xf32>
    %105 = vector.broadcast %102 : vector<3x1xf32> to vector<3x384xf32>
    %106 = arith.addf %105, %104 : vector<3x384xf32>
    %107 = vector.extract_strided_slice %101 {offsets = [0, 1], sizes = [3, 1], strides = [1, 1]} : vector<3x4xf32> to vector<3x1xf32>
    %cst_69 = arith.constant 8.000000e+00 : f32
    %108 = vector.broadcast %cst_69 : f32 to vector<3x384xf32>
    %109 = arith.mulf %97, %108 : vector<3x384xf32>
    %110 = vector.broadcast %107 : vector<3x1xf32> to vector<3x384xf32>
    %111 = arith.addf %110, %109 : vector<3x384xf32>
    %112 = vector.extract_strided_slice %101 {offsets = [0, 2], sizes = [3, 1], strides = [1, 1]} : vector<3x4xf32> to vector<3x1xf32>
    %113 = vector.extract_strided_slice %101 {offsets = [0, 3], sizes = [3, 1], strides = [1, 1]} : vector<3x4xf32> to vector<3x1xf32>
    %114 = vector.broadcast %112 : vector<3x1xf32> to vector<3x384xf32>
    %115 = arith.mulf %67, %114 : vector<3x384xf32>
    %116 = arith.addf %115, %106 : vector<3x384xf32>
    %117 = vector.broadcast %113 : vector<3x1xf32> to vector<3x384xf32>
    %118 = arith.mulf %68, %117 : vector<3x384xf32>
    %119 = arith.addf %118, %111 : vector<3x384xf32>
    %120 = math.exp %71 : vector<3x384xf32>
    %121 = vector.broadcast %112 : vector<3x1xf32> to vector<3x384xf32>
    %122 = arith.mulf %120, %121 : vector<3x384xf32>
    %123 = math.exp %74 : vector<3x384xf32>
    %124 = vector.broadcast %113 : vector<3x1xf32> to vector<3x384xf32>
    %125 = arith.mulf %123, %124 : vector<3x384xf32>
    %126 = arith.index_cast %arg0 : i32 to index
    %c0_70 = arith.constant 0 : index
    %127 = memref.load %arg7[%126, %c0_70] : memref<2x5xf32, #tpu.memory_space<smem>>
    %128 = arith.index_cast %arg0 : i32 to index
    %c1_71 = arith.constant 1 : index
    %129 = memref.load %arg7[%128, %c1_71] : memref<2x5xf32, #tpu.memory_space<smem>>
    %cst_72 = arith.constant 5.000000e-01 : f32
    %130 = vector.broadcast %cst_72 : f32 to vector<3x384xf32>
    %131 = arith.mulf %130, %122 : vector<3x384xf32>
    %132 = arith.subf %116, %131 : vector<3x384xf32>
    %cst_73 = arith.constant 1.000000e+00 : f32
    %133 = arith.subf %129, %cst_73 : f32
    %cst_74 = arith.constant 0.000000e+00 : f32
    %134 = vector.broadcast %cst_74 : f32 to vector<3x384xf32>
    %135 = arith.maximumf %134, %132 : vector<3x384xf32>
    %136 = vector.broadcast %133 : f32 to vector<3x384xf32>
    %137 = arith.minimumf %136, %135 : vector<3x384xf32>
    %c0_75 = arith.constant 0 : index
    %c0_76 = arith.constant 0 : index
    %c0_77 = arith.constant 0 : index
    %c0_78 = arith.constant 0 : index
    %138 = vector.load %arg8[%c0_75, %c0_76, %c0_77, %c0_78] : memref<1x5x3x384xf32, #tpu.memory_space<vmem>>, vector<1x1x3x384xf32>
    %139 = vector.shape_cast %138 : vector<1x1x3x384xf32> to vector<3x384xf32>
    %140 = vector.shape_cast %137 : vector<3x384xf32> to vector<1x1x3x384xf32>
    tpu.vector_store %arg8[%c0_75, %c0_76, %c0_77, %c0_78], %140 {strides = array<i32>} : memref<1x5x3x384xf32, #tpu.memory_space<vmem>>, vector<1x1x3x384xf32>,
    %cst_79 = arith.constant 5.000000e-01 : f32
    %141 = vector.broadcast %cst_79 : f32 to vector<3x384xf32>
    %142 = arith.mulf %141, %125 : vector<3x384xf32>
    %143 = arith.subf %119, %142 : vector<3x384xf32>
    %cst_80 = arith.constant 1.000000e+00 : f32
    %144 = arith.subf %127, %cst_80 : f32
    %cst_81 = arith.constant 0.000000e+00 : f32
    %145 = vector.broadcast %cst_81 : f32 to vector<3x384xf32>
    %146 = arith.maximumf %145, %143 : vector<3x384xf32>
    %147 = vector.broadcast %144 : f32 to vector<3x384xf32>
    %148 = arith.minimumf %147, %146 : vector<3x384xf32>
    %c0_82 = arith.constant 0 : index
    %c1_83 = arith.constant 1 : index
    %c0_84 = arith.constant 0 : index
    %c0_85 = arith.constant 0 : index
    %149 = vector.load %arg8[%c0_82, %c1_83, %c0_84, %c0_85] : memref<1x5x3x384xf32, #tpu.memory_space<vmem>>, vector<1x1x3x384xf32>
    %150 = vector.shape_cast %149 : vector<1x1x3x384xf32> to vector<3x384xf32>
    %151 = vector.shape_cast %148 : vector<3x384xf32> to vector<1x1x3x384xf32>
    tpu.vector_store %arg8[%c0_82, %c1_83, %c0_84, %c0_85], %151 {strides = array<i32>} : memref<1x5x3x384xf32, #tpu.memory_space<vmem>>, vector<1x1x3x384xf32>,
    %cst_86 = arith.constant 5.000000e-01 : f32
    %152 = vector.broadcast %cst_86 : f32 to vector<3x384xf32>
    %153 = arith.mulf %152, %122 : vector<3x384xf32>
    %154 = arith.addf %116, %153 : vector<3x384xf32>
    %cst_87 = arith.constant 1.000000e+00 : f32
    %155 = vector.broadcast %cst_87 : f32 to vector<3x384xf32>
    %156 = arith.subf %154, %155 : vector<3x384xf32>
    %cst_88 = arith.constant 1.000000e+00 : f32
    %157 = arith.subf %129, %cst_88 : f32
    %cst_89 = arith.constant 0.000000e+00 : f32
    %158 = vector.broadcast %cst_89 : f32 to vector<3x384xf32>
    %159 = arith.maximumf %158, %156 : vector<3x384xf32>
    %160 = vector.broadcast %157 : f32 to vector<3x384xf32>
    %161 = arith.minimumf %160, %159 : vector<3x384xf32>
    %c0_90 = arith.constant 0 : index
    %c2_91 = arith.constant 2 : index
    %c0_92 = arith.constant 0 : index
    %c0_93 = arith.constant 0 : index
    %162 = vector.load %arg8[%c0_90, %c2_91, %c0_92, %c0_93] : memref<1x5x3x384xf32, #tpu.memory_space<vmem>>, vector<1x1x3x384xf32>
    %163 = vector.shape_cast %162 : vector<1x1x3x384xf32> to vector<3x384xf32>
    %164 = vector.shape_cast %161 : vector<3x384xf32> to vector<1x1x3x384xf32>
    tpu.vector_store %arg8[%c0_90, %c2_91, %c0_92, %c0_93], %164 {strides = array<i32>} : memref<1x5x3x384xf32, #tpu.memory_space<vmem>>, vector<1x1x3x384xf32>,
    %cst_94 = arith.constant 5.000000e-01 : f32
    %165 = vector.broadcast %cst_94 : f32 to vector<3x384xf32>
    %166 = arith.mulf %165, %125 : vector<3x384xf32>
    %167 = arith.addf %119, %166 : vector<3x384xf32>
    %cst_95 = arith.constant 1.000000e+00 : f32
    %168 = vector.broadcast %cst_95 : f32 to vector<3x384xf32>
    %169 = arith.subf %167, %168 : vector<3x384xf32>
    %cst_96 = arith.constant 1.000000e+00 : f32
    %170 = arith.subf %127, %cst_96 : f32
    %cst_97 = arith.constant 0.000000e+00 : f32
    %171 = vector.broadcast %cst_97 : f32 to vector<3x384xf32>
    %172 = arith.maximumf %171, %169 : vector<3x384xf32>
    %173 = vector.broadcast %170 : f32 to vector<3x384xf32>
    %174 = arith.minimumf %173, %172 : vector<3x384xf32>
    %c0_98 = arith.constant 0 : index
    %c3_99 = arith.constant 3 : index
    %c0_100 = arith.constant 0 : index
    %c0_101 = arith.constant 0 : index
    %175 = vector.load %arg8[%c0_98, %c3_99, %c0_100, %c0_101] : memref<1x5x3x384xf32, #tpu.memory_space<vmem>>, vector<1x1x3x384xf32>
    %176 = vector.shape_cast %175 : vector<1x1x3x384xf32> to vector<3x384xf32>
    %177 = vector.shape_cast %174 : vector<3x384xf32> to vector<1x1x3x384xf32>
    tpu.vector_store %arg8[%c0_98, %c3_99, %c0_100, %c0_101], %177 {strides = array<i32>} : memref<1x5x3x384xf32, #tpu.memory_space<vmem>>, vector<1x1x3x384xf32>,
    %c0_102 = arith.constant 0 : index
    %c4_103 = arith.constant 4 : index
    %c0_104 = arith.constant 0 : index
    %c0_105 = arith.constant 0 : index
    %178 = vector.load %arg8[%c0_102, %c4_103, %c0_104, %c0_105] : memref<1x5x3x384xf32, #tpu.memory_space<vmem>>, vector<1x1x3x384xf32>
    %179 = vector.shape_cast %178 : vector<1x1x3x384xf32> to vector<3x384xf32>
    %180 = vector.shape_cast %79 : vector<3x384xf32> to vector<1x1x3x384xf32>
    tpu.vector_store %arg8[%c0_102, %c4_103, %c0_104, %c0_105], %180 {strides = array<i32>} : memref<1x5x3x384xf32, #tpu.memory_space<vmem>>, vector<1x1x3x384xf32>,
    return
  }
  func.func @transform_0(%arg0: i32) -> (i32, i32, i32) {
    %c0_i32 = arith.constant 0 : i32
    %c0_i32_0 = arith.constant 0 : i32
    %c0_i32_1 = arith.constant 0 : i32
    return %arg0, %c0_i32, %c0_i32_0 : i32, i32, i32
  }
  func.func @transform_1(%arg0: i32) -> (i32, i32, i32) {
    %c0_i32 = arith.constant 0 : i32
    %c0_i32_0 = arith.constant 0 : i32
    %c0_i32_1 = arith.constant 0 : i32
    %c0_i32_2 = arith.constant 0 : i32
    return %c0_i32, %c0_i32_0, %c0_i32_1 : i32, i32, i32
  }
  func.func @transform_2(%arg0: i32) -> (i32, i32) {
    %c0_i32 = arith.constant 0 : i32
    %c0_i32_0 = arith.constant 0 : i32
    %c0_i32_1 = arith.constant 0 : i32
    return %c0_i32, %c0_i32_0 : i32, i32
  }
  func.func @transform_3(%arg0: i32) -> (i32, i32) {
    %c0_i32 = arith.constant 0 : i32
    %c0_i32_0 = arith.constant 0 : i32
    %c0_i32_1 = arith.constant 0 : i32
    return %c0_i32, %c0_i32_0 : i32, i32
  }
  func.func @transform_4(%arg0: i32) -> (i32, i32) {
    %c0_i32 = arith.constant 0 : i32
    %c0_i32_0 = arith.constant 0 : i32
    %c0_i32_1 = arith.constant 0 : i32
    return %c0_i32, %c0_i32_0 : i32, i32
  }
  func.func @transform_5(%arg0: i32) -> (i32, i32) {
    %c0_i32 = arith.constant 0 : i32
    %c0_i32_0 = arith.constant 0 : i32
    %c0_i32_1 = arith.constant 0 : i32
    return %c0_i32, %c0_i32_0 : i32, i32
  }
  func.func @transform_6(%arg0: i32) -> (i32, i32) {
    %c0_i32 = arith.constant 0 : i32
    %c0_i32_0 = arith.constant 0 : i32
    %c0_i32_1 = arith.constant 0 : i32
    return %c0_i32, %c0_i32_0 : i32, i32
  }
  func.func @transform_7(%arg0: i32) -> (i32, i32, i32, i32) {
    %c0_i32 = arith.constant 0 : i32
    %c0_i32_0 = arith.constant 0 : i32
    %c0_i32_1 = arith.constant 0 : i32
    %c0_i32_2 = arith.constant 0 : i32
    return %arg0, %c0_i32, %c0_i32_0, %c0_i32_1 : i32, i32, i32, i32
  }
}

</mosaic_0001>

<llo_original>
// kernel: tpu_custom_call.1
$region0: #{tpu_custom_call.1}
  #allocation0 [shape = 'u32[]', space=smem, size = 0x4, offset = 0x4, fixed_abs, tag = 'smem constant byte address 0x4 - core index']
  #allocation1 [shape = 'u32[72,128]{1,0:T(1,128)}', space=vmem, size = 0x9000, scoped, tag = 'internal scratch']
  %s0 = inlined_call_operand.vmem [shape: f32[2,4,512], index: 0, kind: input, shape index: {}]
  %s1 = inlined_call_operand.vmem [shape: f32[9,32,4], index: 1, kind: input, shape index: {}]
  %s2 = inlined_call_operand.vmem [shape: f32[32,1], index: 2, kind: input, shape index: {}]
  %s3 = inlined_call_operand.vmem [shape: f32[18,32], index: 3, kind: input, shape index: {}]
  %s4 = inlined_call_operand.vmem [shape: f32[18,1], index: 4, kind: input, shape index: {}]
  %s5 = inlined_call_operand.vmem [shape: f32[3,4], index: 5, kind: input, shape index: {}]
  %s6 = inlined_call_operand.vmem [shape: f32[2,5], index: 6, kind: input, shape index: {}]
  %s7 = inlined_call_operand.vmem [shape: f32[2,5,3,384], index: 7, kind: output, shape index: {}]
  %s8 = sld [smem:[#allocation0]]
  $region65: #{tpu_custom_call.1} parent=0
    _
  %s10 = ssub.s32 1, %s8
  %s11 = scalar_select 0, %s10, %s8
  $region1: #{tpu_custom_call.1} parent=0
    #allocation2 [shape = 'u8[1024]{0}', space=smem, size = 0x400, scoped, tag = 'input window, operand 6, single buffered']
    #allocation3 [shape = 's32[2]{0}', space=sflag, size = 0x8, scoped, tag = 'scoped memory for tpu_custom_call.1']
    %12 = vsyncpa [#allocation3], 0
    loop: start=0, step=1, limit=4
    $region2: #{tpu_custom_call.1} parent=1 // loop_pre_header
      _
    $region3: #{tpu_custom_call.1} parent=1 // loop_header
      %s14 = sphi 0, %s18
      %p15 = scmp.ge.s32.totalorder %s14, 4
      %s24 = sphi 0, %s26
      %s27 = sphi 0, %s24
      %s28 = sphi 0, %s27
      %s44 = sphi 0, %s28
      %s48 = sphi 0, %s48
      %s50 = sphi 0, %s48
      %s51 = sphi 0, %s50
      %s65 = sphi 0, %s51
      %s69 = sphi 0, %s69
      %s71 = sphi 0, %s69
      %s72 = sphi 0, %s71
      %s86 = sphi 0, %s72
      %s90 = sphi 0, %s90
      %s92 = sphi 0, %s90
      %s93 = sphi 0, %s92
      %s107 = sphi 0, %s93
      %s111 = sphi 0, %s111
      %s113 = sphi 0, %s111
      %s114 = sphi 0, %s113
      %s128 = sphi 0, %s114
      %s132 = sphi 0, %s132
      %s134 = sphi 0, %s132
      %s135 = sphi 0, %s134
      %s149 = sphi 0, %s135
      %s153 = sphi 0, %s153
      %s155 = sphi 0, %s153
      %s156 = sphi 0, %s155
      %s170 = sphi 0, %s156
      %s176 = sphi 0, %s178
      %s179 = sphi 0, %s176
      %s180 = sphi 0, %s179
      %s196 = sphi 0, %s180
    $region4: #{tpu_custom_call.1} parent=1 // loop_header_branch
      %17 = sbr.rel (%p15) target = $region8
    $region5: #{tpu_custom_call.1} parent=1 // loop_body
      %s19 = ssub.s32 %s14, 1
      %s20 = ssub.s32 %s14, 2
      %s21 = sadd.s32 %s14, 1
      %s22 = ssub.s32 %s14, %s21
      %p23 = scmp.eq.s32.totalorder %s22, 0
      %s25 = sadd.s32 %s24, 1
      %s26 = scalar_select %p23, %s24, %s25
      %p29 = pneg %p23
      %p30 = scmp.eq.s32.totalorder %s14, 1
      %p31 = por %p29, %p30
      %p32 = scmp.ne.s32.totalorder %s24, %s27
      %p33 = scmp.eq.s32.totalorder %s14, 0
      %p34 = por %p32, %p33
      %p35 = scmp.ne.s32.totalorder %s24, %s27
      %p36 = scmp.eq.s32.totalorder %s19, 1
      %p37 = por %p35, %p36
      %p38 = scmp.ne.s32.totalorder %s27, %s28
      %p39 = scmp.eq.s32.totalorder %s19, 0
      %p40 = por %p38, %p39
      %p41 = scmp.ne.s32.totalorder %s27, %s28
      %p42 = scmp.eq.s32.totalorder %s20, 1
      %p43 = por %p41, %p42
      %p45 = scmp.ne.s32.totalorder %s28, %s44
      %p46 = scmp.eq.s32.totalorder %s20, 0
      %p47 = por %p45, %p46
      %s49 = sadd.s32 %s48, 1
      %p52 = scmp.eq.s32.totalorder %s14, 1
      %p53 = scmp.ne.s32.totalorder %s48, %s50
      %p54 = scmp.eq.s32.totalorder %s14, 0
      %p55 = por %p53, %p54
      %p56 = scmp.ne.s32.totalorder %s48, %s50
      %p57 = scmp.eq.s32.totalorder %s19, 1
      %p58 = por %p56, %p57
      %p59 = scmp.ne.s32.totalorder %s50, %s51
      %p60 = scmp.eq.s32.totalorder %s19, 0
      %p61 = por %p59, %p60
      %p62 = scmp.ne.s32.totalorder %s50, %s51
      %p63 = scmp.eq.s32.totalorder %s20, 1
      %p64 = por %p62, %p63
      %p66 = scmp.ne.s32.totalorder %s51, %s65
      %p67 = scmp.eq.s32.totalorder %s20, 0
      %p68 = por %p66, %p67
      %s70 = sadd.s32 %s69, 1
      %p73 = scmp.eq.s32.totalorder %s14, 1
      %p74 = scmp.ne.s32.totalorder %s69, %s71
      %p75 = scmp.eq.s32.totalorder %s14, 0
      %p76 = por %p74, %p75
      %p77 = scmp.ne.s32.totalorder %s69, %s71
      %p78 = scmp.eq.s32.totalorder %s19, 1
      %p79 = por %p77, %p78
      %p80 = scmp.ne.s32.totalorder %s71, %s72
      %p81 = scmp.eq.s32.totalorder %s19, 0
      %p82 = por %p80, %p81
      %p83 = scmp.ne.s32.totalorder %s71, %s72
      %p84 = scmp.eq.s32.totalorder %s20, 1
      %p85 = por %p83, %p84
      %p87 = scmp.ne.s32.totalorder %s72, %s86
      %p88 = scmp.eq.s32.totalorder %s20, 0
      %p89 = por %p87, %p88
      %s91 = sadd.s32 %s90, 1
      %p94 = scmp.eq.s32.totalorder %s14, 1
      %p95 = scmp.ne.s32.totalorder %s90, %s92
      %p96 = scmp.eq.s32.totalorder %s14, 0
      %p97 = por %p95, %p96
      %p98 = scmp.ne.s32.totalorder %s90, %s92
      %p99 = scmp.eq.s32.totalorder %s19, 1
      %p100 = por %p98, %p99
      %p101 = scmp.ne.s32.totalorder %s92, %s93
      %p102 = scmp.eq.s32.totalorder %s19, 0
      %p103 = por %p101, %p102
      %p104 = scmp.ne.s32.totalorder %s92, %s93
      %p105 = scmp.eq.s32.totalorder %s20, 1
      %p106 = por %p104, %p105
      %p108 = scmp.ne.s32.totalorder %s93, %s107
      %p109 = scmp.eq.s32.totalorder %s20, 0
      %p110 = por %p108, %p109
      %s112 = sadd.s32 %s111, 1
      %p115 = scmp.eq.s32.totalorder %s14, 1
      %p116 = scmp.ne.s32.totalorder %s111, %s113
      %p117 = scmp.eq.s32.totalorder %s14, 0
      %p118 = por %p116, %p117
      %p119 = scmp.ne.s32.totalorder %s111, %s113
      %p120 = scmp.eq.s32.totalorder %s19, 1
      %p121 = por %p119, %p120
      %p122 = scmp.ne.s32.totalorder %s113, %s114
      %p123 = scmp.eq.s32.totalorder %s19, 0
      %p124 = por %p122, %p123
      %p125 = scmp.ne.s32.totalorder %s113, %s114
      %p126 = scmp.eq.s32.totalorder %s20, 1
      %p127 = por %p125, %p126
      %p129 = scmp.ne.s32.totalorder %s114, %s128
      %p130 = scmp.eq.s32.totalorder %s20, 0
      %p131 = por %p129, %p130
      %s133 = sadd.s32 %s132, 1
      %p136 = scmp.eq.s32.totalorder %s14, 1
      %p137 = scmp.ne.s32.totalorder %s132, %s134
      %p138 = scmp.eq.s32.totalorder %s14, 0
      %p139 = por %p137, %p138
      %p140 = scmp.ne.s32.totalorder %s132, %s134
      %p141 = scmp.eq.s32.totalorder %s19, 1
      %p142 = por %p140, %p141
      %p143 = scmp.ne.s32.totalorder %s134, %s135
      %p144 = scmp.eq.s32.totalorder %s19, 0
      %p145 = por %p143, %p144
      %p146 = scmp.ne.s32.totalorder %s134, %s135
      %p147 = scmp.eq.s32.totalorder %s20, 1
      %p148 = por %p146, %p147
      %p150 = scmp.ne.s32.totalorder %s135, %s149
      %p151 = scmp.eq.s32.totalorder %s20, 0
      %p152 = por %p150, %p151
      %s154 = sadd.s32 %s153, 1
      %p157 = scmp.eq.s32.totalorder %s14, 1
      %p158 = scmp.ne.s32.totalorder %s153, %s155
      %p159 = scmp.eq.s32.totalorder %s14, 0
      %p160 = por %p158, %p159
      %p161 = scmp.ne.s32.totalorder %s153, %s155
      %p162 = scmp.eq.s32.totalorder %s19, 1
      %p163 = por %p161, %p162
      %p164 = scmp.ne.s32.totalorder %s155, %s156
      %p165 = scmp.eq.s32.totalorder %s19, 0
      %p166 = por %p164, %p165
      %p167 = scmp.ne.s32.totalorder %s155, %s156
      %p168 = scmp.eq.s32.totalorder %s20, 1
      %p169 = por %p167, %p168
      %p171 = scmp.ne.s32.totalorder %s156, %s170
      %p172 = scmp.eq.s32.totalorder %s20, 0
      %p173 = por %p171, %p172
      %s174 = ssub.s32 %s14, %s21
      %p175 = scmp.eq.s32.totalorder %s174, 0
      %s177 = sadd.s32 %s176, 1
      %s178 = scalar_select %p175, %s176, %s177
      %p181 = pneg %p175
      %p182 = scmp.eq.s32.totalorder %s14, 1
      %p183 = por %p181, %p182
      %p184 = scmp.ne.s32.totalorder %s176, %s179
      %p185 = scmp.eq.s32.totalorder %s14, 0
      %p186 = por %p184, %p185
      %p187 = scmp.ne.s32.totalorder %s176, %s179
      %p188 = scmp.eq.s32.totalorder %s19, 1
      %p189 = por %p187, %p188
      %p190 = scmp.ne.s32.totalorder %s179, %s180
      %p191 = scmp.eq.s32.totalorder %s19, 0
      %p192 = por %p190, %p191
      %p193 = scmp.ne.s32.totalorder %s179, %s180
      %p194 = scmp.eq.s32.totalorder %s20, 1
      %p195 = por %p193, %p194
      %p197 = scmp.ne.s32.totalorder %s180, %s196
      %p198 = scmp.eq.s32.totalorder %s20, 0
      %p199 = por %p197, %p198
      %p200 = scmp.le.s32.totalorder 1, %s14
      %p201 = scmp.lt.s32.totalorder %s14, 3
      %p202 = pnand %p200, %p201
      %p203 = pneg %p202
      // Predicated region
      $region9: #{tpu_custom_call.1} parent=5 // pred_check
        _
      $region10: #{tpu_custom_call.1} parent=5 // pred_check_branch
        %205 = sbr.rel (%p202) target = $region12
      $region11: #{tpu_custom_call.1} parent=5 // pred_region
        %s206 = ssub.s32 %s14, 1
        // Predicated region
        $region13: #{tpu_custom_call.1} parent=11 // pred_check
          %p207 = pneg %p61
        $region14: #{tpu_custom_call.1} parent=11 // pred_check_branch
          %209 = sbr.rel (%p207) target = $region16
        $region15: #{tpu_custom_call.1} parent=11 // pred_region
          _
        $region16: #{tpu_custom_call.1} parent=11 // pred_fallthru
          _
        // Predicated region
        $region17: #{tpu_custom_call.1} parent=11 // pred_check
          %p210 = pneg %p82
        $region18: #{tpu_custom_call.1} parent=11 // pred_check_branch
          %212 = sbr.rel (%p210) target = $region20
        $region19: #{tpu_custom_call.1} parent=11 // pred_region
          _
        $region20: #{tpu_custom_call.1} parent=11 // pred_fallthru
          _
        // Predicated region
        $region21: #{tpu_custom_call.1} parent=11 // pred_check
          %p213 = pneg %p103
        $region22: #{tpu_custom_call.1} parent=11 // pred_check_branch
          %215 = sbr.rel (%p213) target = $region24
        $region23: #{tpu_custom_call.1} parent=11 // pred_region
          _
        $region24: #{tpu_custom_call.1} parent=11 // pred_fallthru
          _
        // Predicated region
        $region25: #{tpu_custom_call.1} parent=11 // pred_check
          %p216 = pneg %p124
        $region26: #{tpu_custom_call.1} parent=11 // pred_check_branch
          %218 = sbr.rel (%p216) target = $region28
        $region27: #{tpu_custom_call.1} parent=11 // pred_region
          _
        $region28: #{tpu_custom_call.1} parent=11 // pred_fallthru
          _
        // Predicated region
        $region29: #{tpu_custom_call.1} parent=11 // pred_check
          %p219 = pneg %p145
        $region30: #{tpu_custom_call.1} parent=11 // pred_check_branch
          %221 = sbr.rel (%p219) target = $region32
        $region31: #{tpu_custom_call.1} parent=11 // pred_region
          _
        $region32: #{tpu_custom_call.1} parent=11 // pred_fallthru
          _
        // Predicated region
        $region33: #{tpu_custom_call.1} parent=11 // pred_check
          %p222 = pneg %p166
        $region34: #{tpu_custom_call.1} parent=11 // pred_check_branch
          %224 = sbr.rel (%p222) target = $region36
        $region35: #{tpu_custom_call.1} parent=11 // pred_region
          %226 = vsyncadd [#allocation3], 0
          %s228 = sshll.u32 %s6, 4
          %s229 = int_to_ptr.vmem [resolvable:$true] %s228
          %231 = dma.vmem_to_smem %s229, 32, [#allocation2], [#allocation3]
        $region36: #{tpu_custom_call.1} parent=11 // pred_fallthru
          _
      $region12: #{tpu_custom_call.1} parent=5 // pred_fallthru
        _
      %p232 = scmp.lt.s32.totalorder %s14, 2
      // Predicated region
      $region37: #{tpu_custom_call.1} parent=5 // pred_check
        %p233 = pneg %p232
      $region38: #{tpu_custom_call.1} parent=5 // pred_check_branch
        %235 = sbr.rel (%p233) target = $region40
      $region39: #{tpu_custom_call.1} parent=5 // pred_region
        // Predicated region
        $region41: #{tpu_custom_call.1} parent=39 // pred_check
          %p236 = pneg %p34
        $region42: #{tpu_custom_call.1} parent=39 // pred_check_branch
          %238 = sbr.rel (%p236) target = $region44
        $region43: #{tpu_custom_call.1} parent=39 // pred_region
          %p239 = scmp.lt.s32.totalorder %s14, 1
          %s240 = scalar_select %p239, %s14, 1
          %s241 = smul.addr %s240, 4
          %s242 = smul.addr %s241, 4
          %s243 = scalar_lea.vmem %s0, %s242
        $region44: #{tpu_custom_call.1} parent=39 // pred_fallthru
          _
      $region40: #{tpu_custom_call.1} parent=5 // pred_fallthru
        _
      %p244 = scmp.le.s32.totalorder 1, %s14
      %p245 = scmp.lt.s32.totalorder %s14, 3
      %p246 = pnand %p244, %p245
      %p247 = pneg %p246
      // Predicated region
      $region45: #{tpu_custom_call.1} parent=5 // pred_check
        _
      $region46: #{tpu_custom_call.1} parent=5 // pred_check_branch
        %249 = sbr.rel (%p246) target = $region48
      $region47: #{tpu_custom_call.1} parent=5 // pred_region
        %s250 = ssub.s32 %s14, 1
        // Predicated region
        $region49: #{tpu_custom_call.1} parent=47 // pred_check
          %p251 = pneg %p166
        $region50: #{tpu_custom_call.1} parent=47 // pred_check_branch
          %253 = sbr.rel (%p251) target = $region52
        $region51: #{tpu_custom_call.1} parent=47 // pred_region
          %255 = dma.done [#allocation3], 32
        $region52: #{tpu_custom_call.1} parent=47 // pred_fallthru
          _
        %256 = sfence
        %p257 = scmp.lt.s32.totalorder %s19, 1
        %s258 = scalar_select %p257, %s19, 1
        %s259 = smul.addr %s258, 4
        %s260 = smul.addr %s259, 4
        %s261 = scalar_lea.vmem %s0, %s260
        %p262 = pneg %p40
        %p263 = pneg %p37
        %p264 = pneg %p61
        %p265 = pneg %p58
        %p266 = pneg %p82
        %p267 = pneg %p79
        %p268 = pneg %p103
        %p269 = pneg %p100
        %p270 = pneg %p124
        %p271 = pneg %p121
        %p272 = pneg %p145
        %p273 = pneg %p142
        %p274 = pneg %p166
        %p275 = pneg %p163
        %p276 = pneg %p192
        %p277 = pneg %p189
        %p278 = scmp.lt.s32.totalorder %s19, 1
        %s279 = scalar_select %p278, %s19, 1
        %s280 = smul.addr %s279, 15
        %s281 = smul.addr %s280, 4
        %s282 = scalar_lea.vmem %s7, %s281
        %p283 = scmp.lt.s32.totalorder %s19, 1
        %s284 = scalar_select %p283, %s19, 1
        %s285 = smul.addr %s284, 4
        %s286 = smul.addr %s285, 4
        %s287 = scalar_lea.vmem %s0, %s286
        %p288 = scmp.lt.s32.totalorder %s19, 1
        %s289 = scalar_select %p288, %s19, 1
        %s290 = smul.addr %s289, 15
        %s291 = smul.addr %s290, 4
        %s292 = scalar_lea.vmem %s7, %s291
        %v293 = vld [vmem:[%s287] sm:$0xff]
        %v294 = vld [vmem:[%s287 + $0x8] sm:$0xf]
        %v295 = vld [vmem:[%s1] sm:$0xff]
        %v296 = vld [vmem:[%s1 + $0x8] sm:$0xff]
        %v297 = vld [vmem:[%s1 + $0x10] sm:$0xff]
        %v298 = vld [vmem:[%s1 + $0x18] sm:$0xff]
        %v299 = vld [vmem:[%s287] sm:$0xff]
        %v300 = vld [vmem:[%s287 + $0x8] sm:$0xff]
        %s301 = scalar_lea.vmem %s1, 32
        %v302 = vld [vmem:[%s301] sm:$0xff]
        %v303 = vld [vmem:[%s301 + $0x8] sm:$0xff]
        %v304 = vld [vmem:[%s301 + $0x10] sm:$0xff]
        %v305 = vld [vmem:[%s301 + $0x18] sm:$0xff]
        %308 = vst [vmem:[#allocation1] ss:$2 sm:$0xff] %v299
        %s309 = scalar_lea.vmem [#allocation1], 16
        %310 = vst [vmem:[%s309] ss:$2 sm:$0xff] %v300
        %v311 = vld.sshfl [vmem:[#allocation1] sm:$0xff pattern:$0x75316420]
        %v312 = vld.sshfl [vmem:[#allocation1 + $0x8] sm:$0xff pattern:$0x75316420]
        %v313 = vld.sshfl [vmem:[#allocation1 + $0x10] sm:$0xff pattern:$0x75316420]
        %v314 = vld.sshfl [vmem:[#allocation1 + $0x18] sm:$0xff pattern:$0x75316420]
        %315 = vrot.lane.b32.xlu0 %v311, 127
        %v316 = vpop.permute.xlu0 %315
        %317 = vrot.lane.b32.xlu0 %v312, 127
        %v318 = vpop.permute.xlu0 %317
        %319 = vrot.lane.b32.xlu0 %v313, 127
        %v320 = vpop.permute.xlu0 %319
        %321 = vrot.lane.b32.xlu0 %v314, 127
        %v322 = vpop.permute.xlu0 %321
        %vm323 = vcmask 1039360
        %v324 = vsel %vm323, %v316, %v318
        %v325 = vsel %vm323, %v318, %v320
        %v326 = vsel %vm323, %v320, %v322
        %vm327 = vcmask 31744
        %v329 = vsel %vm327, %v302, 0
        %v332 = vsel %vm327, %v303, 0
        %v335 = vsel %vm327, %v304, 0
        %v338 = vsel %vm327, %v305, 0
        %vm340 = vcmask 1043456
        %v341 = vsel %vm340, %v324, 0
        %v343 = vsel %vm340, %v325, 0
        %v345 = vsel %vm340, %v326, 0
        %347 = vmatpush.msra.mxu0 0.0
        %348 = vmatpush.msra.mxu0 0.0
        %349 = vmatpush.msra.mxu0 0.0
        %350 = vmatpush.msra.mxu0 0.0
        %351 = vmatpush.msra.mxu0 0.0
        %352 = vmatpush.msra.mxu0 0.0
        %353 = vmatpush.msra.mxu0 0.0
        %354 = vmatpush.msra.mxu0 0.0
        %355 = vmatpush.msra.mxu0 0.0
        %356 = vmatpush.msra.mxu0 0.0
        %357 = vmatpush.msra.mxu0 0.0
        %358 = vmatpush.msra.mxu0 0.0
        %359 = vmatpush.msra.mxu0 0.0
        %360 = vmatpush.msra.mxu0 0.0
        %361 = vmatpush.msra.mxu0 0.0
        %362 = vmatpush.msra.mxu0 %v341
        %363 = vmatmul.f32.gmra.mxu0 %v329
        %v364 = vpop.f32.mrf.mxu0
        %v365 = vadd.f32 0.0, %v364
        %366 = vmatmul.f32.gmra.mxu0 %v332
        %v367 = vpop.f32.mrf.mxu0
        %v368 = vadd.f32 0.0, %v367
        %369 = vmatmul.f32.gmra.mxu0 %v335
        %v370 = vpop.f32.mrf.mxu0
        %v371 = vadd.f32 0.0, %v370
        %372 = vmatmul.f32.gmra.mxu0 %v338
        %v373 = vpop.f32.mrf.mxu0
        %v374 = vadd.f32 0.0, %v373
        %375 = vdwg.mxu0
        %376 = vmatpush.msra.mxu0 0.0
        %377 = vmatpush.msra.mxu0 0.0
        %378 = vmatpush.msra.mxu0 0.0
        %379 = vmatpush.msra.mxu0 0.0
        %380 = vmatpush.msra.mxu0 0.0
        %381 = vmatpush.msra.mxu0 0.0
        %382 = vmatpush.msra.mxu0 0.0
        %383 = vmatpush.msra.mxu0 0.0
        %384 = vmatpush.msra.mxu0 0.0
        %385 = vmatpush.msra.mxu0 0.0
        %386 = vmatpush.msra.mxu0 0.0
        %387 = vmatpush.msra.mxu0 0.0
        %388 = vmatpush.msra.mxu0 0.0
        %389 = vmatpush.msra.mxu0 0.0
        %390 = vmatpush.msra.mxu0 0.0
        %391 = vmatpush.msra.mxu0 %v343
        %392 = vmatmul.f32.gmra.mxu0 %v329
        %v393 = vpop.f32.mrf.mxu0
        %v394 = vadd.f32 0.0, %v393
        %395 = vmatmul.f32.gmra.mxu0 %v332
        %v396 = vpop.f32.mrf.mxu0
        %v397 = vadd.f32 0.0, %v396
        %398 = vmatmul.f32.gmra.mxu0 %v335
        %v399 = vpop.f32.mrf.mxu0
        %v400 = vadd.f32 0.0, %v399
        %401 = vmatmul.f32.gmra.mxu0 %v338
        %v402 = vpop.f32.mrf.mxu0
        %v403 = vadd.f32 0.0, %v402
        %404 = vdwg.mxu0
        %405 = vmatpush.msra.mxu0 0.0
        %406 = vmatpush.msra.mxu0 0.0
        %407 = vmatpush.msra.mxu0 0.0
        %408 = vmatpush.msra.mxu0 0.0
        %409 = vmatpush.msra.mxu0 0.0
        %410 = vmatpush.msra.mxu0 0.0
        %411 = vmatpush.msra.mxu0 0.0
        %412 = vmatpush.msra.mxu0 0.0
        %413 = vmatpush.msra.mxu0 0.0
        %414 = vmatpush.msra.mxu0 0.0
        %415 = vmatpush.msra.mxu0 0.0
        %416 = vmatpush.msra.mxu0 0.0
        %417 = vmatpush.msra.mxu0 0.0
        %418 = vmatpush.msra.mxu0 0.0
        %419 = vmatpush.msra.mxu0 0.0
        %420 = vmatpush.msra.mxu0 %v345
        %421 = vmatmul.f32.gmra.mxu0 %v329
        %v422 = vpop.f32.mrf.mxu0
        %v423 = vadd.f32 0.0, %v422
        %424 = vmatmul.f32.gmra.mxu0 %v332
        %v425 = vpop.f32.mrf.mxu0
        %v426 = vadd.f32 0.0, %v425
        %427 = vmatmul.f32.gmra.mxu0 %v335
        %v428 = vpop.f32.mrf.mxu0
        %v429 = vadd.f32 0.0, %v428
        %430 = vmatmul.f32.gmra.mxu0 %v338
        %v431 = vpop.f32.mrf.mxu0
        %v432 = vadd.f32 0.0, %v431
        %433 = vdwg.mxu0
        %436 = vst [vmem:[#allocation1] ss:$2 sm:$0xff] %v293
        %s437 = scalar_lea.vmem [#allocation1], 16
        %438 = vst [vmem:[%s437] ss:$2 sm:$0xff] %v294
        %v439 = vld.sshfl [vmem:[#allocation1] sm:$0xff pattern:$0x75316420]
        %v440 = vld.sshfl [vmem:[#allocation1 + $0x8] sm:$0xff pattern:$0x75316420]
        %v441 = vld.sshfl [vmem:[#allocation1 + $0x10] sm:$0xff pattern:$0x75316420]
        %v443 = vsel %vm327, %v295, 0
        %v446 = vsel %vm327, %v296, 0
        %v449 = vsel %vm327, %v297, 0
        %v452 = vsel %vm327, %v298, 0
        %v454 = vsel %vm340, %v439, 0
        %v456 = vsel %vm340, %v440, 0
        %v458 = vsel %vm340, %v441, 0
        %460 = vmatpush.msra.mxu0 0.0
        %461 = vmatpush.msra.mxu0 0.0
        %462 = vmatpush.msra.mxu0 0.0
        %463 = vmatpush.msra.mxu0 0.0
        %464 = vmatpush.msra.mxu0 0.0
        %465 = vmatpush.msra.mxu0 0.0
        %466 = vmatpush.msra.mxu0 0.0
        %467 = vmatpush.msra.mxu0 0.0
        %468 = vmatpush.msra.mxu0 0.0
        %469 = vmatpush.msra.mxu0 0.0
        %470 = vmatpush.msra.mxu0 0.0
        %471 = vmatpush.msra.mxu0 0.0
        %472 = vmatpush.msra.mxu0 0.0
        %473 = vmatpush.msra.mxu0 0.0
        %474 = vmatpush.msra.mxu0 0.0
        %475 = vmatpush.msra.mxu0 %v454
        %476 = vmatmul.f32.gmra.mxu0 %v443
        %v477 = vpop.f32.mrf.mxu0
        %v478 = vadd.f32 %v365, %v477
        %479 = vmatmul.f32.gmra.mxu0 %v446
        %v480 = vpop.f32.mrf.mxu0
        %v481 = vadd.f32 %v368, %v480
        %482 = vmatmul.f32.gmra.mxu0 %v449
        %v483 = vpop.f32.mrf.mxu0
        %v484 = vadd.f32 %v371, %v483
        %485 = vmatmul.f32.gmra.mxu0 %v452
        %v486 = vpop.f32.mrf.mxu0
        %v487 = vadd.f32 %v374, %v486
        %488 = vdwg.mxu0
        %489 = vmatpush.msra.mxu0 0.0
        %490 = vmatpush.msra.mxu0 0.0
        %491 = vmatpush.msra.mxu0 0.0
        %492 = vmatpush.msra.mxu0 0.0
        %493 = vmatpush.msra.mxu0 0.0
        %494 = vmatpush.msra.mxu0 0.0
        %495 = vmatpush.msra.mxu0 0.0
        %496 = vmatpush.msra.mxu0 0.0
        %497 = vmatpush.msra.mxu0 0.0
        %498 = vmatpush.msra.mxu0 0.0
        %499 = vmatpush.msra.mxu0 0.0
        %500 = vmatpush.msra.mxu0 0.0
        %501 = vmatpush.msra.mxu0 0.0
        %502 = vmatpush.msra.mxu0 0.0
        %503 = vmatpush.msra.mxu0 0.0
        %504 = vmatpush.msra.mxu0 %v456
        %505 = vmatmul.f32.gmra.mxu0 %v443
        %v506 = vpop.f32.mrf.mxu0
        %v507 = vadd.f32 %v394, %v506
        %508 = vmatmul.f32.gmra.mxu0 %v446
        %v509 = vpop.f32.mrf.mxu0
        %v510 = vadd.f32 %v397, %v509
        %511 = vmatmul.f32.gmra.mxu0 %v449
        %v512 = vpop.f32.mrf.mxu0
        %v513 = vadd.f32 %v400, %v512
        %514 = vmatmul.f32.gmra.mxu0 %v452
        %v515 = vpop.f32.mrf.mxu0
        %v516 = vadd.f32 %v403, %v515
        %517 = vdwg.mxu0
        %518 = vmatpush.msra.mxu0 0.0
        %519 = vmatpush.msra.mxu0 0.0
        %520 = vmatpush.msra.mxu0 0.0
        %521 = vmatpush.msra.mxu0 0.0
        %522 = vmatpush.msra.mxu0 0.0
        %523 = vmatpush.msra.mxu0 0.0
        %524 = vmatpush.msra.mxu0 0.0
        %525 = vmatpush.msra.mxu0 0.0
        %526 = vmatpush.msra.mxu0 0.0
        %527 = vmatpush.msra.mxu0 0.0
        %528 = vmatpush.msra.mxu0 0.0
        %529 = vmatpush.msra.mxu0 0.0
        %530 = vmatpush.msra.mxu0 0.0
        %531 = vmatpush.msra.mxu0 0.0
        %532 = vmatpush.msra.mxu0 0.0
        %533 = vmatpush.msra.mxu0 %v458
        %534 = vmatmul.f32.gmra.mxu0 %v443
        %v535 = vpop.f32.mrf.mxu0
        %v536 = vadd.f32 %v423, %v535
        %537 = vmatmul.f32.gmra.mxu0 %v446
        %v538 = vpop.f32.mrf.mxu0
        %v539 = vadd.f32 %v426, %v538
        %540 = vmatmul.f32.gmra.mxu0 %v449
        %v541 = vpop.f32.mrf.mxu0
        %v542 = vadd.f32 %v429, %v541
        %543 = vmatmul.f32.gmra.mxu0 %v452
        %v544 = vpop.f32.mrf.mxu0
        %v545 = vadd.f32 %v432, %v544
        %546 = vdwg.mxu0
        %v547 = vld [vmem:[%s287] sm:$0xff]
        %v548 = vld [vmem:[%s287 + $0x8] sm:$0xff]
        %s549 = scalar_lea.vmem %s1, 64
        %v550 = vld [vmem:[%s549] sm:$0xff]
        %v551 = vld [vmem:[%s549 + $0x8] sm:$0xff]
        %v552 = vld [vmem:[%s549 + $0x10] sm:$0xff]
        %v553 = vld [vmem:[%s549 + $0x18] sm:$0xff]
        %556 = vst [vmem:[#allocation1] ss:$2 sm:$0xff] %v547
        %s557 = scalar_lea.vmem [#allocation1], 16
        %558 = vst [vmem:[%s557] ss:$2 sm:$0xff] %v548
        %v559 = vld.sshfl [vmem:[#allocation1] sm:$0xff pattern:$0x75316420]
        %v560 = vld.sshfl [vmem:[#allocation1 + $0x8] sm:$0xff pattern:$0x75316420]
        %v561 = vld.sshfl [vmem:[#allocation1 + $0x10] sm:$0xff pattern:$0x75316420]
        %v562 = vld.sshfl [vmem:[#allocation1 + $0x18] sm:$0xff pattern:$0x75316420]
        %563 = vrot.lane.b32.xlu0 %v559, 126
        %v564 = vpop.permute.xlu0 %563
        %565 = vrot.lane.b32.xlu0 %v560, 126
        %v566 = vpop.permute.xlu0 %565
        %567 = vrot.lane.b32.xlu0 %v561, 126
        %v568 = vpop.permute.xlu0 %567
        %569 = vrot.lane.b32.xlu0 %v562, 126
        %v570 = vpop.permute.xlu0 %569
        %vm571 = vcmask 1031168
        %v572 = vsel %vm571, %v564, %v566
        %v573 = vsel %vm571, %v566, %v568
        %v574 = vsel %vm571, %v568, %v570
        %v576 = vsel %vm327, %v550, 0
        %v579 = vsel %vm327, %v551, 0
        %v582 = vsel %vm327, %v552, 0
        %v585 = vsel %vm327, %v553, 0
        %v587 = vsel %vm340, %v572, 0
        %v589 = vsel %vm340, %v573, 0
        %v591 = vsel %vm340, %v574, 0
        %593 = vmatpush.msra.mxu0 0.0
        %594 = vmatpush.msra.mxu0 0.0
        %595 = vmatpush.msra.mxu0 0.0
        %596 = vmatpush.msra.mxu0 0.0
        %597 = vmatpush.msra.mxu0 0.0
        %598 = vmatpush.msra.mxu0 0.0
        %599 = vmatpush.msra.mxu0 0.0
        %600 = vmatpush.msra.mxu0 0.0
        %601 = vmatpush.msra.mxu0 0.0
        %602 = vmatpush.msra.mxu0 0.0
        %603 = vmatpush.msra.mxu0 0.0
        %604 = vmatpush.msra.mxu0 0.0
        %605 = vmatpush.msra.mxu0 0.0
        %606 = vmatpush.msra.mxu0 0.0
        %607 = vmatpush.msra.mxu0 0.0
        %608 = vmatpush.msra.mxu0 %v587
        %609 = vmatmul.f32.gmra.mxu0 %v576
        %v610 = vpop.f32.mrf.mxu0
        %v611 = vadd.f32 0.0, %v610
        %612 = vmatmul.f32.gmra.mxu0 %v579
        %v613 = vpop.f32.mrf.mxu0
        %v614 = vadd.f32 0.0, %v613
        %615 = vmatmul.f32.gmra.mxu0 %v582
        %v616 = vpop.f32.mrf.mxu0
        %v617 = vadd.f32 0.0, %v616
        %618 = vmatmul.f32.gmra.mxu0 %v585
        %v619 = vpop.f32.mrf.mxu0
        %v620 = vadd.f32 0.0, %v619
        %621 = vdwg.mxu0
        %622 = vmatpush.msra.mxu0 0.0
        %623 = vmatpush.msra.mxu0 0.0
        %624 = vmatpush.msra.mxu0 0.0
        %625 = vmatpush.msra.mxu0 0.0
        %626 = vmatpush.msra.mxu0 0.0
        %627 = vmatpush.msra.mxu0 0.0
        %628 = vmatpush.msra.mxu0 0.0
        %629 = vmatpush.msra.mxu0 0.0
        %630 = vmatpush.msra.mxu0 0.0
        %631 = vmatpush.msra.mxu0 0.0
        %632 = vmatpush.msra.mxu0 0.0
        %633 = vmatpush.msra.mxu0 0.0
        %634 = vmatpush.msra.mxu0 0.0
        %635 = vmatpush.msra.mxu0 0.0
        %636 = vmatpush.msra.mxu0 0.0
        %637 = vmatpush.msra.mxu0 %v589
        %638 = vmatmul.f32.gmra.mxu0 %v576
        %v639 = vpop.f32.mrf.mxu0
        %v640 = vadd.f32 0.0, %v639
        %641 = vmatmul.f32.gmra.mxu0 %v579
        %v642 = vpop.f32.mrf.mxu0
        %v643 = vadd.f32 0.0, %v642
        %644 = vmatmul.f32.gmra.mxu0 %v582
        %v645 = vpop.f32.mrf.mxu0
        %v646 = vadd.f32 0.0, %v645
        %647 = vmatmul.f32.gmra.mxu0 %v585
        %v648 = vpop.f32.mrf.mxu0
        %v649 = vadd.f32 0.0, %v648
        %650 = vdwg.mxu0
        %651 = vmatpush.msra.mxu0 0.0
        %652 = vmatpush.msra.mxu0 0.0
        %653 = vmatpush.msra.mxu0 0.0
        %654 = vmatpush.msra.mxu0 0.0
        %655 = vmatpush.msra.mxu0 0.0
        %656 = vmatpush.msra.mxu0 0.0
        %657 = vmatpush.msra.mxu0 0.0
        %658 = vmatpush.msra.mxu0 0.0
        %659 = vmatpush.msra.mxu0 0.0
        %660 = vmatpush.msra.mxu0 0.0
        %661 = vmatpush.msra.mxu0 0.0
        %662 = vmatpush.msra.mxu0 0.0
        %663 = vmatpush.msra.mxu0 0.0
        %664 = vmatpush.msra.mxu0 0.0
        %665 = vmatpush.msra.mxu0 0.0
        %666 = vmatpush.msra.mxu0 %v591
        %667 = vmatmul.f32.gmra.mxu0 %v576
        %v668 = vpop.f32.mrf.mxu0
        %v669 = vadd.f32 0.0, %v668
        %670 = vmatmul.f32.gmra.mxu0 %v579
        %v671 = vpop.f32.mrf.mxu0
        %v672 = vadd.f32 0.0, %v671
        %673 = vmatmul.f32.gmra.mxu0 %v582
        %v674 = vpop.f32.mrf.mxu0
        %v675 = vadd.f32 0.0, %v674
        %676 = vmatmul.f32.gmra.mxu0 %v585
        %v677 = vpop.f32.mrf.mxu0
        %v678 = vadd.f32 0.0, %v677
        %679 = vdwg.mxu0
        %v680 = vadd.f32 %v478, %v611
        %v681 = vadd.f32 %v507, %v640
        %v682 = vadd.f32 %v536, %v669
        %v683 = vadd.f32 %v481, %v614
        %v684 = vadd.f32 %v510, %v643
        %v685 = vadd.f32 %v539, %v672
        %v686 = vadd.f32 %v484, %v617
        %v687 = vadd.f32 %v513, %v646
        %v688 = vadd.f32 %v542, %v675
        %v689 = vadd.f32 %v487, %v620
        %v690 = vadd.f32 %v516, %v649
        %v691 = vadd.f32 %v545, %v678
        %v692 = vld [vmem:[%s287] sm:$0xff]
        %v693 = vld [vmem:[%s287 + $0x8] sm:$0xff]
        %s694 = scalar_lea.vmem %s1, 96
        %v695 = vld [vmem:[%s694] sm:$0xff]
        %v696 = vld [vmem:[%s694 + $0x8] sm:$0xff]
        %v697 = vld [vmem:[%s694 + $0x10] sm:$0xff]
        %v698 = vld [vmem:[%s694 + $0x18] sm:$0xff]
        %701 = vst [vmem:[#allocation1] ss:$2 sm:$0xff] %v692
        %s702 = scalar_lea.vmem [#allocation1], 16
        %703 = vst [vmem:[%s702] ss:$2 sm:$0xff] %v693
        %v704 = vld.sshfl [vmem:[#allocation1] sm:$0xff pattern:$0x75316420]
        %v705 = vld.sshfl [vmem:[#allocation1 + $0x8] sm:$0xff pattern:$0x75316420]
        %v706 = vld.sshfl [vmem:[#allocation1 + $0x10] sm:$0xff pattern:$0x75316420]
        %v707 = vld.sshfl [vmem:[#allocation1 + $0x18] sm:$0xff pattern:$0x75316420]
        %708 = vrot.lane.b32.xlu0 %v704, 110
        %v709 = vpop.permute.xlu0 %708
        %710 = vrot.lane.b32.xlu0 %v705, 110
        %v711 = vpop.permute.xlu0 %710
        %712 = vrot.lane.b32.xlu0 %v706, 110
        %v713 = vpop.permute.xlu0 %712
        %714 = vrot.lane.b32.xlu0 %v707, 110
        %v715 = vpop.permute.xlu0 %714
        %vm716 = vcmask 900096
        %v717 = vsel %vm716, %v709, %v711
        %v718 = vsel %vm716, %v711, %v713
        %v719 = vsel %vm716, %v713, %v715
        %v721 = vsel %vm327, %v695, 0
        %v724 = vsel %vm327, %v696, 0
        %v727 = vsel %vm327, %v697, 0
        %v730 = vsel %vm327, %v698, 0
        %v732 = vsel %vm340, %v717, 0
        %v734 = vsel %vm340, %v718, 0
        %v736 = vsel %vm340, %v719, 0
        %738 = vmatpush.msra.mxu0 0.0
        %739 = vmatpush.msra.mxu0 0.0
        %740 = vmatpush.msra.mxu0 0.0
        %741 = vmatpush.msra.mxu0 0.0
        %742 = vmatpush.msra.mxu0 0.0
        %743 = vmatpush.msra.mxu0 0.0
        %744 = vmatpush.msra.mxu0 0.0
        %745 = vmatpush.msra.mxu0 0.0
        %746 = vmatpush.msra.mxu0 0.0
        %747 = vmatpush.msra.mxu0 0.0
        %748 = vmatpush.msra.mxu0 0.0
        %749 = vmatpush.msra.mxu0 0.0
        %750 = vmatpush.msra.mxu0 0.0
        %751 = vmatpush.msra.mxu0 0.0
        %752 = vmatpush.msra.mxu0 0.0
        %753 = vmatpush.msra.mxu0 %v732
        %754 = vmatmul.f32.gmra.mxu0 %v721
        %v755 = vpop.f32.mrf.mxu0
        %v756 = vadd.f32 0.0, %v755
        %757 = vmatmul.f32.gmra.mxu0 %v724
        %v758 = vpop.f32.mrf.mxu0
        %v759 = vadd.f32 0.0, %v758
        %760 = vmatmul.f32.gmra.mxu0 %v727
        %v761 = vpop.f32.mrf.mxu0
        %v762 = vadd.f32 0.0, %v761
        %763 = vmatmul.f32.gmra.mxu0 %v730
        %v764 = vpop.f32.mrf.mxu0
        %v765 = vadd.f32 0.0, %v764
        %766 = vdwg.mxu0
        %767 = vmatpush.msra.mxu0 0.0
        %768 = vmatpush.msra.mxu0 0.0
        %769 = vmatpush.msra.mxu0 0.0
        %770 = vmatpush.msra.mxu0 0.0
        %771 = vmatpush.msra.mxu0 0.0
        %772 = vmatpush.msra.mxu0 0.0
        %773 = vmatpush.msra.mxu0 0.0
        %774 = vmatpush.msra.mxu0 0.0
        %775 = vmatpush.msra.mxu0 0.0
        %776 = vmatpush.msra.mxu0 0.0
        %777 = vmatpush.msra.mxu0 0.0
        %778 = vmatpush.msra.mxu0 0.0
        %779 = vmatpush.msra.mxu0 0.0
        %780 = vmatpush.msra.mxu0 0.0
        %781 = vmatpush.msra.mxu0 0.0
        %782 = vmatpush.msra.mxu0 %v734
        %783 = vmatmul.f32.gmra.mxu0 %v721
        %v784 = vpop.f32.mrf.mxu0
        %v785 = vadd.f32 0.0, %v784
        %786 = vmatmul.f32.gmra.mxu0 %v724
        %v787 = vpop.f32.mrf.mxu0
        %v788 = vadd.f32 0.0, %v787
        %789 = vmatmul.f32.gmra.mxu0 %v727
        %v790 = vpop.f32.mrf.mxu0
        %v791 = vadd.f32 0.0, %v790
        %792 = vmatmul.f32.gmra.mxu0 %v730
        %v793 = vpop.f32.mrf.mxu0
        %v794 = vadd.f32 0.0, %v793
        %795 = vdwg.mxu0
        %796 = vmatpush.msra.mxu0 0.0
        %797 = vmatpush.msra.mxu0 0.0
        %798 = vmatpush.msra.mxu0 0.0
        %799 = vmatpush.msra.mxu0 0.0
        %800 = vmatpush.msra.mxu0 0.0
        %801 = vmatpush.msra.mxu0 0.0
        %802 = vmatpush.msra.mxu0 0.0
        %803 = vmatpush.msra.mxu0 0.0
        %804 = vmatpush.msra.mxu0 0.0
        %805 = vmatpush.msra.mxu0 0.0
        %806 = vmatpush.msra.mxu0 0.0
        %807 = vmatpush.msra.mxu0 0.0
        %808 = vmatpush.msra.mxu0 0.0
        %809 = vmatpush.msra.mxu0 0.0
        %810 = vmatpush.msra.mxu0 0.0
        %811 = vmatpush.msra.mxu0 %v736
        %812 = vmatmul.f32.gmra.mxu0 %v721
        %v813 = vpop.f32.mrf.mxu0
        %v814 = vadd.f32 0.0, %v813
        %815 = vmatmul.f32.gmra.mxu0 %v724
        %v816 = vpop.f32.mrf.mxu0
        %v817 = vadd.f32 0.0, %v816
        %818 = vmatmul.f32.gmra.mxu0 %v727
        %v819 = vpop.f32.mrf.mxu0
        %v820 = vadd.f32 0.0, %v819
        %821 = vmatmul.f32.gmra.mxu0 %v730
        %v822 = vpop.f32.mrf.mxu0
        %v823 = vadd.f32 0.0, %v822
        %824 = vdwg.mxu0
        %v825 = vadd.f32 %v680, %v756
        %v826 = vadd.f32 %v681, %v785
        %v827 = vadd.f32 %v682, %v814
        %v828 = vadd.f32 %v683, %v759
        %v829 = vadd.f32 %v684, %v788
        %v830 = vadd.f32 %v685, %v817
        %v831 = vadd.f32 %v686, %v762
        %v832 = vadd.f32 %v687, %v791
        %v833 = vadd.f32 %v688, %v820
        %v834 = vadd.f32 %v689, %v765
        %v835 = vadd.f32 %v690, %v794
        %v836 = vadd.f32 %v691, %v823
        %v837 = vld [vmem:[%s287] sm:$0xff]
        %v838 = vld [vmem:[%s287 + $0x8] sm:$0xff]
        %s839 = scalar_lea.vmem %s1, 128
        %v840 = vld [vmem:[%s839] sm:$0xff]
        %v841 = vld [vmem:[%s839 + $0x8] sm:$0xff]
        %v842 = vld [vmem:[%s839 + $0x10] sm:$0xff]
        %v843 = vld [vmem:[%s839 + $0x18] sm:$0xff]
        %846 = vst [vmem:[#allocation1] ss:$2 sm:$0xff] %v837
        %s847 = scalar_lea.vmem [#allocation1], 16
        %848 = vst [vmem:[%s847] ss:$2 sm:$0xff] %v838
        %v849 = vld.sshfl [vmem:[#allocation1] sm:$0xff pattern:$0x75316420]
        %v850 = vld.sshfl [vmem:[#allocation1 + $0x8] sm:$0xff pattern:$0x75316420]
        %v851 = vld.sshfl [vmem:[#allocation1 + $0x10] sm:$0xff pattern:$0x75316420]
        %v852 = vld.sshfl [vmem:[#allocation1 + $0x18] sm:$0xff pattern:$0x75316420]
        %853 = vrot.lane.b32.xlu0 %v849, 109
        %v854 = vpop.permute.xlu0 %853
        %855 = vrot.lane.b32.xlu0 %v850, 109
        %v856 = vpop.permute.xlu0 %855
        %857 = vrot.lane.b32.xlu0 %v851, 109
        %v858 = vpop.permute.xlu0 %857
        %859 = vrot.lane.b32.xlu0 %v852, 109
        %v860 = vpop.permute.xlu0 %859
        %vm861 = vcmask 891904
        %v862 = vsel %vm861, %v854, %v856
        %v863 = vsel %vm861, %v856, %v858
        %v864 = vsel %vm861, %v858, %v860
        %v866 = vsel %vm327, %v840, 0
        %v869 = vsel %vm327, %v841, 0
        %v872 = vsel %vm327, %v842, 0
        %v875 = vsel %vm327, %v843, 0
        %v877 = vsel %vm340, %v862, 0
        %v879 = vsel %vm340, %v863, 0
        %v881 = vsel %vm340, %v864, 0
        %883 = vmatpush.msra.mxu0 0.0
        %884 = vmatpush.msra.mxu0 0.0
        %885 = vmatpush.msra.mxu0 0.0
        %886 = vmatpush.msra.mxu0 0.0
        %887 = vmatpush.msra.mxu0 0.0
        %888 = vmatpush.msra.mxu0 0.0
        %889 = vmatpush.msra.mxu0 0.0
        %890 = vmatpush.msra.mxu0 0.0
        %891 = vmatpush.msra.mxu0 0.0
        %892 = vmatpush.msra.mxu0 0.0
        %893 = vmatpush.msra.mxu0 0.0
        %894 = vmatpush.msra.mxu0 0.0
        %895 = vmatpush.msra.mxu0 0.0
        %896 = vmatpush.msra.mxu0 0.0
        %897 = vmatpush.msra.mxu0 0.0
        %898 = vmatpush.msra.mxu0 %v877
        %899 = vmatmul.f32.gmra.mxu0 %v866
        %v900 = vpop.f32.mrf.mxu0
        %v901 = vadd.f32 0.0, %v900
        %902 = vmatmul.f32.gmra.mxu0 %v869
        %v903 = vpop.f32.mrf.mxu0
        %v904 = vadd.f32 0.0, %v903
        %905 = vmatmul.f32.gmra.mxu0 %v872
        %v906 = vpop.f32.mrf.mxu0
        %v907 = vadd.f32 0.0, %v906
        %908 = vmatmul.f32.gmra.mxu0 %v875
        %v909 = vpop.f32.mrf.mxu0
        %v910 = vadd.f32 0.0, %v909
        %911 = vdwg.mxu0
        %912 = vmatpush.msra.mxu0 0.0
        %913 = vmatpush.msra.mxu0 0.0
        %914 = vmatpush.msra.mxu0 0.0
        %915 = vmatpush.msra.mxu0 0.0
        %916 = vmatpush.msra.mxu0 0.0
        %917 = vmatpush.msra.mxu0 0.0
        %918 = vmatpush.msra.mxu0 0.0
        %919 = vmatpush.msra.mxu0 0.0
        %920 = vmatpush.msra.mxu0 0.0
        %921 = vmatpush.msra.mxu0 0.0
        %922 = vmatpush.msra.mxu0 0.0
        %923 = vmatpush.msra.mxu0 0.0
        %924 = vmatpush.msra.mxu0 0.0
        %925 = vmatpush.msra.mxu0 0.0
        %926 = vmatpush.msra.mxu0 0.0
        %927 = vmatpush.msra.mxu0 %v879
        %928 = vmatmul.f32.gmra.mxu0 %v866
        %v929 = vpop.f32.mrf.mxu0
        %v930 = vadd.f32 0.0, %v929
        %931 = vmatmul.f32.gmra.mxu0 %v869
        %v932 = vpop.f32.mrf.mxu0
        %v933 = vadd.f32 0.0, %v932
        %934 = vmatmul.f32.gmra.mxu0 %v872
        %v935 = vpop.f32.mrf.mxu0
        %v936 = vadd.f32 0.0, %v935
        %937 = vmatmul.f32.gmra.mxu0 %v875
        %v938 = vpop.f32.mrf.mxu0
        %v939 = vadd.f32 0.0, %v938
        %940 = vdwg.mxu0
        %941 = vmatpush.msra.mxu0 0.0
        %942 = vmatpush.msra.mxu0 0.0
        %943 = vmatpush.msra.mxu0 0.0
        %944 = vmatpush.msra.mxu0 0.0
        %945 = vmatpush.msra.mxu0 0.0
        %946 = vmatpush.msra.mxu0 0.0
        %947 = vmatpush.msra.mxu0 0.0
        %948 = vmatpush.msra.mxu0 0.0
        %949 = vmatpush.msra.mxu0 0.0
        %950 = vmatpush.msra.mxu0 0.0
        %951 = vmatpush.msra.mxu0 0.0
        %952 = vmatpush.msra.mxu0 0.0
        %953 = vmatpush.msra.mxu0 0.0
        %954 = vmatpush.msra.mxu0 0.0
        %955 = vmatpush.msra.mxu0 0.0
        %956 = vmatpush.msra.mxu0 %v881
        %957 = vmatmul.f32.gmra.mxu0 %v866
        %v958 = vpop.f32.mrf.mxu0
        %v959 = vadd.f32 0.0, %v958
        %960 = vmatmul.f32.gmra.mxu0 %v869
        %v961 = vpop.f32.mrf.mxu0
        %v962 = vadd.f32 0.0, %v961
        %963 = vmatmul.f32.gmra.mxu0 %v872
        %v964 = vpop.f32.mrf.mxu0
        %v965 = vadd.f32 0.0, %v964
        %966 = vmatmul.f32.gmra.mxu0 %v875
        %v967 = vpop.f32.mrf.mxu0
        %v968 = vadd.f32 0.0, %v967
        %969 = vdwg.mxu0
        %v970 = vadd.f32 %v825, %v901
        %v971 = vadd.f32 %v826, %v930
        %v972 = vadd.f32 %v827, %v959
        %v973 = vadd.f32 %v828, %v904
        %v974 = vadd.f32 %v829, %v933
        %v975 = vadd.f32 %v830, %v962
        %v976 = vadd.f32 %v831, %v907
        %v977 = vadd.f32 %v832, %v936
        %v978 = vadd.f32 %v833, %v965
        %v979 = vadd.f32 %v834, %v910
        %v980 = vadd.f32 %v835, %v939
        %v981 = vadd.f32 %v836, %v968
        %v982 = vld [vmem:[%s287] sm:$0xff]
        %v983 = vld [vmem:[%s287 + $0x8] sm:$0xff]
        %s984 = scalar_lea.vmem %s1, 160
        %v985 = vld [vmem:[%s984] sm:$0xff]
        %v986 = vld [vmem:[%s984 + $0x8] sm:$0xff]
        %v987 = vld [vmem:[%s984 + $0x10] sm:$0xff]
        %v988 = vld [vmem:[%s984 + $0x18] sm:$0xff]
        %991 = vst [vmem:[#allocation1] ss:$2 sm:$0xff] %v982
        %s992 = scalar_lea.vmem [#allocation1], 16
        %993 = vst [vmem:[%s992] ss:$2 sm:$0xff] %v983
        %v994 = vld.sshfl [vmem:[#allocation1] sm:$0xff pattern:$0x75316420]
        %v995 = vld.sshfl [vmem:[#allocation1 + $0x8] sm:$0xff pattern:$0x75316420]
        %v996 = vld.sshfl [vmem:[#allocation1 + $0x10] sm:$0xff pattern:$0x75316420]
        %v997 = vld.sshfl [vmem:[#allocation1 + $0x18] sm:$0xff pattern:$0x75316420]
        %998 = vrot.lane.b32.xlu0 %v994, 108
        %v999 = vpop.permute.xlu0 %998
        %1000 = vrot.lane.b32.xlu0 %v995, 108
        %v1001 = vpop.permute.xlu0 %1000
        %1002 = vrot.lane.b32.xlu0 %v996, 108
        %v1003 = vpop.permute.xlu0 %1002
        %1004 = vrot.lane.b32.xlu0 %v997, 108
        %v1005 = vpop.permute.xlu0 %1004
        %vm1006 = vcmask 883712
        %v1007 = vsel %vm1006, %v999, %v1001
        %v1008 = vsel %vm1006, %v1001, %v1003
        %v1009 = vsel %vm1006, %v1003, %v1005
        %v1011 = vsel %vm327, %v985, 0
        %v1014 = vsel %vm327, %v986, 0
        %v1017 = vsel %vm327, %v987, 0
        %v1020 = vsel %vm327, %v988, 0
        %v1022 = vsel %vm340, %v1007, 0
        %v1024 = vsel %vm340, %v1008, 0
        %v1026 = vsel %vm340, %v1009, 0
        %1028 = vmatpush.msra.mxu0 0.0
        %1029 = vmatpush.msra.mxu0 0.0
        %1030 = vmatpush.msra.mxu0 0.0
        %1031 = vmatpush.msra.mxu0 0.0
        %1032 = vmatpush.msra.mxu0 0.0
        %1033 = vmatpush.msra.mxu0 0.0
        %1034 = vmatpush.msra.mxu0 0.0
        %1035 = vmatpush.msra.mxu0 0.0
        %1036 = vmatpush.msra.mxu0 0.0
        %1037 = vmatpush.msra.mxu0 0.0
        %1038 = vmatpush.msra.mxu0 0.0
        %1039 = vmatpush.msra.mxu0 0.0
        %1040 = vmatpush.msra.mxu0 0.0
        %1041 = vmatpush.msra.mxu0 0.0
        %1042 = vmatpush.msra.mxu0 0.0
        %1043 = vmatpush.msra.mxu0 %v1022
        %1044 = vmatmul.f32.gmra.mxu0 %v1011
        %v1045 = vpop.f32.mrf.mxu0
        %v1046 = vadd.f32 0.0, %v1045
        %1047 = vmatmul.f32.gmra.mxu0 %v1014
        %v1048 = vpop.f32.mrf.mxu0
        %v1049 = vadd.f32 0.0, %v1048
        %1050 = vmatmul.f32.gmra.mxu0 %v1017
        %v1051 = vpop.f32.mrf.mxu0
        %v1052 = vadd.f32 0.0, %v1051
        %1053 = vmatmul.f32.gmra.mxu0 %v1020
        %v1054 = vpop.f32.mrf.mxu0
        %v1055 = vadd.f32 0.0, %v1054
        %1056 = vdwg.mxu0
        %1057 = vmatpush.msra.mxu0 0.0
        %1058 = vmatpush.msra.mxu0 0.0
        %1059 = vmatpush.msra.mxu0 0.0
        %1060 = vmatpush.msra.mxu0 0.0
        %1061 = vmatpush.msra.mxu0 0.0
        %1062 = vmatpush.msra.mxu0 0.0
        %1063 = vmatpush.msra.mxu0 0.0
        %1064 = vmatpush.msra.mxu0 0.0
        %1065 = vmatpush.msra.mxu0 0.0
        %1066 = vmatpush.msra.mxu0 0.0
        %1067 = vmatpush.msra.mxu0 0.0
        %1068 = vmatpush.msra.mxu0 0.0
        %1069 = vmatpush.msra.mxu0 0.0
        %1070 = vmatpush.msra.mxu0 0.0
        %1071 = vmatpush.msra.mxu0 0.0
        %1072 = vmatpush.msra.mxu0 %v1024
        %1073 = vmatmul.f32.gmra.mxu0 %v1011
        %v1074 = vpop.f32.mrf.mxu0
        %v1075 = vadd.f32 0.0, %v1074
        %1076 = vmatmul.f32.gmra.mxu0 %v1014
        %v1077 = vpop.f32.mrf.mxu0
        %v1078 = vadd.f32 0.0, %v1077
        %1079 = vmatmul.f32.gmra.mxu0 %v1017
        %v1080 = vpop.f32.mrf.mxu0
        %v1081 = vadd.f32 0.0, %v1080
        %1082 = vmatmul.f32.gmra.mxu0 %v1020
        %v1083 = vpop.f32.mrf.mxu0
        %v1084 = vadd.f32 0.0, %v1083
        %1085 = vdwg.mxu0
        %1086 = vmatpush.msra.mxu0 0.0
        %1087 = vmatpush.msra.mxu0 0.0
        %1088 = vmatpush.msra.mxu0 0.0
        %1089 = vmatpush.msra.mxu0 0.0
        %1090 = vmatpush.msra.mxu0 0.0
        %1091 = vmatpush.msra.mxu0 0.0
        %1092 = vmatpush.msra.mxu0 0.0
        %1093 = vmatpush.msra.mxu0 0.0
        %1094 = vmatpush.msra.mxu0 0.0
        %1095 = vmatpush.msra.mxu0 0.0
        %1096 = vmatpush.msra.mxu0 0.0
        %1097 = vmatpush.msra.mxu0 0.0
        %1098 = vmatpush.msra.mxu0 0.0
        %1099 = vmatpush.msra.mxu0 0.0
        %1100 = vmatpush.msra.mxu0 0.0
        %1101 = vmatpush.msra.mxu0 %v1026
        %1102 = vmatmul.f32.gmra.mxu0 %v1011
        %v1103 = vpop.f32.mrf.mxu0
        %v1104 = vadd.f32 0.0, %v1103
        %1105 = vmatmul.f32.gmra.mxu0 %v1014
        %v1106 = vpop.f32.mrf.mxu0
        %v1107 = vadd.f32 0.0, %v1106
        %1108 = vmatmul.f32.gmra.mxu0 %v1017
        %v1109 = vpop.f32.mrf.mxu0
        %v1110 = vadd.f32 0.0, %v1109
        %1111 = vmatmul.f32.gmra.mxu0 %v1020
        %v1112 = vpop.f32.mrf.mxu0
        %v1113 = vadd.f32 0.0, %v1112
        %1114 = vdwg.mxu0
        %v1115 = vadd.f32 %v970, %v1046
        %v1116 = vadd.f32 %v971, %v1075
        %v1117 = vadd.f32 %v972, %v1104
        %v1118 = vadd.f32 %v973, %v1049
        %v1119 = vadd.f32 %v974, %v1078
        %v1120 = vadd.f32 %v975, %v1107
        %v1121 = vadd.f32 %v976, %v1052
        %v1122 = vadd.f32 %v977, %v1081
        %v1123 = vadd.f32 %v978, %v1110
        %v1124 = vadd.f32 %v979, %v1055
        %v1125 = vadd.f32 %v980, %v1084
        %v1126 = vadd.f32 %v981, %v1113
        %v1127 = vld [vmem:[%s287] sm:$0xff]
        %v1128 = vld [vmem:[%s287 + $0x8] sm:$0xff]
        %s1129 = scalar_lea.vmem %s1, 192
        %v1130 = vld [vmem:[%s1129] sm:$0xff]
        %v1131 = vld [vmem:[%s1129 + $0x8] sm:$0xff]
        %v1132 = vld [vmem:[%s1129 + $0x10] sm:$0xff]
        %v1133 = vld [vmem:[%s1129 + $0x18] sm:$0xff]
        %1136 = vst [vmem:[#allocation1] ss:$2 sm:$0xff] %v1127
        %s1137 = scalar_lea.vmem [#allocation1], 16
        %1138 = vst [vmem:[%s1137] ss:$2 sm:$0xff] %v1128
        %v1139 = vld.sshfl [vmem:[#allocation1] sm:$0xff pattern:$0x75316420]
        %v1140 = vld.sshfl [vmem:[#allocation1 + $0x8] sm:$0xff pattern:$0x75316420]
        %v1141 = vld.sshfl [vmem:[#allocation1 + $0x10] sm:$0xff pattern:$0x75316420]
        %v1142 = vld.sshfl [vmem:[#allocation1 + $0x18] sm:$0xff pattern:$0x75316420]
        %1143 = vrot.lane.b32.xlu0 %v1139, 92
        %v1144 = vpop.permute.xlu0 %1143
        %1145 = vrot.lane.b32.xlu0 %v1140, 92
        %v1146 = vpop.permute.xlu0 %1145
        %1147 = vrot.lane.b32.xlu0 %v1141, 92
        %v1148 = vpop.permute.xlu0 %1147
        %1149 = vrot.lane.b32.xlu0 %v1142, 92
        %v1150 = vpop.permute.xlu0 %1149
        %vm1151 = vcmask 752640
        %v1152 = vsel %vm1151, %v1144, %v1146
        %v1153 = vsel %vm1151, %v1146, %v1148
        %v1154 = vsel %vm1151, %v1148, %v1150
        %v1156 = vsel %vm327, %v1130, 0
        %v1159 = vsel %vm327, %v1131, 0
        %v1162 = vsel %vm327, %v1132, 0
        %v1165 = vsel %vm327, %v1133, 0
        %v1167 = vsel %vm340, %v1152, 0
        %v1169 = vsel %vm340, %v1153, 0
        %v1171 = vsel %vm340, %v1154, 0
        %1173 = vmatpush.msra.mxu0 0.0
        %1174 = vmatpush.msra.mxu0 0.0
        %1175 = vmatpush.msra.mxu0 0.0
        %1176 = vmatpush.msra.mxu0 0.0
        %1177 = vmatpush.msra.mxu0 0.0
        %1178 = vmatpush.msra.mxu0 0.0
        %1179 = vmatpush.msra.mxu0 0.0
        %1180 = vmatpush.msra.mxu0 0.0
        %1181 = vmatpush.msra.mxu0 0.0
        %1182 = vmatpush.msra.mxu0 0.0
        %1183 = vmatpush.msra.mxu0 0.0
        %1184 = vmatpush.msra.mxu0 0.0
        %1185 = vmatpush.msra.mxu0 0.0
        %1186 = vmatpush.msra.mxu0 0.0
        %1187 = vmatpush.msra.mxu0 0.0
        %1188 = vmatpush.msra.mxu0 %v1167
        %1189 = vmatmul.f32.gmra.mxu0 %v1156
        %v1190 = vpop.f32.mrf.mxu0
        %v1191 = vadd.f32 0.0, %v1190
        %1192 = vmatmul.f32.gmra.mxu0 %v1159
        %v1193 = vpop.f32.mrf.mxu0
        %v1194 = vadd.f32 0.0, %v1193
        %1195 = vmatmul.f32.gmra.mxu0 %v1162
        %v1196 = vpop.f32.mrf.mxu0
        %v1197 = vadd.f32 0.0, %v1196
        %1198 = vmatmul.f32.gmra.mxu0 %v1165
        %v1199 = vpop.f32.mrf.mxu0
        %v1200 = vadd.f32 0.0, %v1199
        %1201 = vdwg.mxu0
        %1202 = vmatpush.msra.mxu0 0.0
        %1203 = vmatpush.msra.mxu0 0.0
        %1204 = vmatpush.msra.mxu0 0.0
        %1205 = vmatpush.msra.mxu0 0.0
        %1206 = vmatpush.msra.mxu0 0.0
        %1207 = vmatpush.msra.mxu0 0.0
        %1208 = vmatpush.msra.mxu0 0.0
        %1209 = vmatpush.msra.mxu0 0.0
        %1210 = vmatpush.msra.mxu0 0.0
        %1211 = vmatpush.msra.mxu0 0.0
        %1212 = vmatpush.msra.mxu0 0.0
        %1213 = vmatpush.msra.mxu0 0.0
        %1214 = vmatpush.msra.mxu0 0.0
        %1215 = vmatpush.msra.mxu0 0.0
        %1216 = vmatpush.msra.mxu0 0.0
        %1217 = vmatpush.msra.mxu0 %v1169
        %1218 = vmatmul.f32.gmra.mxu0 %v1156
        %v1219 = vpop.f32.mrf.mxu0
        %v1220 = vadd.f32 0.0, %v1219
        %1221 = vmatmul.f32.gmra.mxu0 %v1159
        %v1222 = vpop.f32.mrf.mxu0
        %v1223 = vadd.f32 0.0, %v1222
        %1224 = vmatmul.f32.gmra.mxu0 %v1162
        %v1225 = vpop.f32.mrf.mxu0
        %v1226 = vadd.f32 0.0, %v1225
        %1227 = vmatmul.f32.gmra.mxu0 %v1165
        %v1228 = vpop.f32.mrf.mxu0
        %v1229 = vadd.f32 0.0, %v1228
        %1230 = vdwg.mxu0
        %1231 = vmatpush.msra.mxu0 0.0
        %1232 = vmatpush.msra.mxu0 0.0
        %1233 = vmatpush.msra.mxu0 0.0
        %1234 = vmatpush.msra.mxu0 0.0
        %1235 = vmatpush.msra.mxu0 0.0
        %1236 = vmatpush.msra.mxu0 0.0
        %1237 = vmatpush.msra.mxu0 0.0
        %1238 = vmatpush.msra.mxu0 0.0
        %1239 = vmatpush.msra.mxu0 0.0
        %1240 = vmatpush.msra.mxu0 0.0
        %1241 = vmatpush.msra.mxu0 0.0
        %1242 = vmatpush.msra.mxu0 0.0
        %1243 = vmatpush.msra.mxu0 0.0
        %1244 = vmatpush.msra.mxu0 0.0
        %1245 = vmatpush.msra.mxu0 0.0
        %1246 = vmatpush.msra.mxu0 %v1171
        %1247 = vmatmul.f32.gmra.mxu0 %v1156
        %v1248 = vpop.f32.mrf.mxu0
        %v1249 = vadd.f32 0.0, %v1248
        %1250 = vmatmul.f32.gmra.mxu0 %v1159
        %v1251 = vpop.f32.mrf.mxu0
        %v1252 = vadd.f32 0.0, %v1251
        %1253 = vmatmul.f32.gmra.mxu0 %v1162
        %v1254 = vpop.f32.mrf.mxu0
        %v1255 = vadd.f32 0.0, %v1254
        %1256 = vmatmul.f32.gmra.mxu0 %v1165
        %v1257 = vpop.f32.mrf.mxu0
        %v1258 = vadd.f32 0.0, %v1257
        %1259 = vdwg.mxu0
        %v1260 = vadd.f32 %v1115, %v1191
        %v1261 = vadd.f32 %v1116, %v1220
        %v1262 = vadd.f32 %v1117, %v1249
        %v1263 = vadd.f32 %v1118, %v1194
        %v1264 = vadd.f32 %v1119, %v1223
        %v1265 = vadd.f32 %v1120, %v1252
        %v1266 = vadd.f32 %v1121, %v1197
        %v1267 = vadd.f32 %v1122, %v1226
        %v1268 = vadd.f32 %v1123, %v1255
        %v1269 = vadd.f32 %v1124, %v1200
        %v1270 = vadd.f32 %v1125, %v1229
        %v1271 = vadd.f32 %v1126, %v1258
        %v1272 = vld [vmem:[%s287] sm:$0xff]
        %v1273 = vld [vmem:[%s287 + $0x8] sm:$0xff]
        %s1274 = scalar_lea.vmem %s1, 224
        %v1275 = vld [vmem:[%s1274] sm:$0xff]
        %v1276 = vld [vmem:[%s1274 + $0x8] sm:$0xff]
        %v1277 = vld [vmem:[%s1274 + $0x10] sm:$0xff]
        %v1278 = vld [vmem:[%s1274 + $0x18] sm:$0xff]
        %1281 = vst [vmem:[#allocation1] ss:$2 sm:$0xff] %v1272
        %s1282 = scalar_lea.vmem [#allocation1], 16
        %1283 = vst [vmem:[%s1282] ss:$2 sm:$0xff] %v1273
        %v1284 = vld.sshfl [vmem:[#allocation1] sm:$0xff pattern:$0x75316420]
        %v1285 = vld.sshfl [vmem:[#allocation1 + $0x8] sm:$0xff pattern:$0x75316420]
        %v1286 = vld.sshfl [vmem:[#allocation1 + $0x10] sm:$0xff pattern:$0x75316420]
        %v1287 = vld.sshfl [vmem:[#allocation1 + $0x18] sm:$0xff pattern:$0x75316420]
        %1288 = vrot.lane.b32.xlu0 %v1284, 91
        %v1289 = vpop.permute.xlu0 %1288
        %1290 = vrot.lane.b32.xlu0 %v1285, 91
        %v1291 = vpop.permute.xlu0 %1290
        %1292 = vrot.lane.b32.xlu0 %v1286, 91
        %v1293 = vpop.permute.xlu0 %1292
        %1294 = vrot.lane.b32.xlu0 %v1287, 91
        %v1295 = vpop.permute.xlu0 %1294
        %vm1296 = vcmask 744448
        %v1297 = vsel %vm1296, %v1289, %v1291
        %v1298 = vsel %vm1296, %v1291, %v1293
        %v1299 = vsel %vm1296, %v1293, %v1295
        %v1301 = vsel %vm327, %v1275, 0
        %v1304 = vsel %vm327, %v1276, 0
        %v1307 = vsel %vm327, %v1277, 0
        %v1310 = vsel %vm327, %v1278, 0
        %v1312 = vsel %vm340, %v1297, 0
        %v1314 = vsel %vm340, %v1298, 0
        %v1316 = vsel %vm340, %v1299, 0
        %1318 = vmatpush.msra.mxu0 0.0
        %1319 = vmatpush.msra.mxu0 0.0
        %1320 = vmatpush.msra.mxu0 0.0
        %1321 = vmatpush.msra.mxu0 0.0
        %1322 = vmatpush.msra.mxu0 0.0
        %1323 = vmatpush.msra.mxu0 0.0
        %1324 = vmatpush.msra.mxu0 0.0
        %1325 = vmatpush.msra.mxu0 0.0
        %1326 = vmatpush.msra.mxu0 0.0
        %1327 = vmatpush.msra.mxu0 0.0
        %1328 = vmatpush.msra.mxu0 0.0
        %1329 = vmatpush.msra.mxu0 0.0
        %1330 = vmatpush.msra.mxu0 0.0
        %1331 = vmatpush.msra.mxu0 0.0
        %1332 = vmatpush.msra.mxu0 0.0
        %1333 = vmatpush.msra.mxu0 %v1312
        %1334 = vmatmul.f32.gmra.mxu0 %v1301
        %v1335 = vpop.f32.mrf.mxu0
        %v1336 = vadd.f32 0.0, %v1335
        %1337 = vmatmul.f32.gmra.mxu0 %v1304
        %v1338 = vpop.f32.mrf.mxu0
        %v1339 = vadd.f32 0.0, %v1338
        %1340 = vmatmul.f32.gmra.mxu0 %v1307
        %v1341 = vpop.f32.mrf.mxu0
        %v1342 = vadd.f32 0.0, %v1341
        %1343 = vmatmul.f32.gmra.mxu0 %v1310
        %v1344 = vpop.f32.mrf.mxu0
        %v1345 = vadd.f32 0.0, %v1344
        %1346 = vdwg.mxu0
        %1347 = vmatpush.msra.mxu0 0.0
        %1348 = vmatpush.msra.mxu0 0.0
        %1349 = vmatpush.msra.mxu0 0.0
        %1350 = vmatpush.msra.mxu0 0.0
        %1351 = vmatpush.msra.mxu0 0.0
        %1352 = vmatpush.msra.mxu0 0.0
        %1353 = vmatpush.msra.mxu0 0.0
        %1354 = vmatpush.msra.mxu0 0.0
        %1355 = vmatpush.msra.mxu0 0.0
        %1356 = vmatpush.msra.mxu0 0.0
        %1357 = vmatpush.msra.mxu0 0.0
        %1358 = vmatpush.msra.mxu0 0.0
        %1359 = vmatpush.msra.mxu0 0.0
        %1360 = vmatpush.msra.mxu0 0.0
        %1361 = vmatpush.msra.mxu0 0.0
        %1362 = vmatpush.msra.mxu0 %v1314
        %1363 = vmatmul.f32.gmra.mxu0 %v1301
        %v1364 = vpop.f32.mrf.mxu0
        %v1365 = vadd.f32 0.0, %v1364
        %1366 = vmatmul.f32.gmra.mxu0 %v1304
        %v1367 = vpop.f32.mrf.mxu0
        %v1368 = vadd.f32 0.0, %v1367
        %1369 = vmatmul.f32.gmra.mxu0 %v1307
        %v1370 = vpop.f32.mrf.mxu0
        %v1371 = vadd.f32 0.0, %v1370
        %1372 = vmatmul.f32.gmra.mxu0 %v1310
        %v1373 = vpop.f32.mrf.mxu0
        %v1374 = vadd.f32 0.0, %v1373
        %1375 = vdwg.mxu0
        %1376 = vmatpush.msra.mxu0 0.0
        %1377 = vmatpush.msra.mxu0 0.0
        %1378 = vmatpush.msra.mxu0 0.0
        %1379 = vmatpush.msra.mxu0 0.0
        %1380 = vmatpush.msra.mxu0 0.0
        %1381 = vmatpush.msra.mxu0 0.0
        %1382 = vmatpush.msra.mxu0 0.0
        %1383 = vmatpush.msra.mxu0 0.0
        %1384 = vmatpush.msra.mxu0 0.0
        %1385 = vmatpush.msra.mxu0 0.0
        %1386 = vmatpush.msra.mxu0 0.0
        %1387 = vmatpush.msra.mxu0 0.0
        %1388 = vmatpush.msra.mxu0 0.0
        %1389 = vmatpush.msra.mxu0 0.0
        %1390 = vmatpush.msra.mxu0 0.0
        %1391 = vmatpush.msra.mxu0 %v1316
        %1392 = vmatmul.f32.gmra.mxu0 %v1301
        %v1393 = vpop.f32.mrf.mxu0
        %v1394 = vadd.f32 0.0, %v1393
        %1395 = vmatmul.f32.gmra.mxu0 %v1304
        %v1396 = vpop.f32.mrf.mxu0
        %v1397 = vadd.f32 0.0, %v1396
        %1398 = vmatmul.f32.gmra.mxu0 %v1307
        %v1399 = vpop.f32.mrf.mxu0
        %v1400 = vadd.f32 0.0, %v1399
        %1401 = vmatmul.f32.gmra.mxu0 %v1310
        %v1402 = vpop.f32.mrf.mxu0
        %v1403 = vadd.f32 0.0, %v1402
        %1404 = vdwg.mxu0
        %v1405 = vadd.f32 %v1260, %v1336
        %v1406 = vadd.f32 %v1261, %v1365
        %v1407 = vadd.f32 %v1262, %v1394
        %v1408 = vadd.f32 %v1263, %v1339
        %v1409 = vadd.f32 %v1264, %v1368
        %v1410 = vadd.f32 %v1265, %v1397
        %v1411 = vadd.f32 %v1266, %v1342
        %v1412 = vadd.f32 %v1267, %v1371
        %v1413 = vadd.f32 %v1268, %v1400
        %v1414 = vadd.f32 %v1269, %v1345
        %v1415 = vadd.f32 %v1270, %v1374
        %v1416 = vadd.f32 %v1271, %v1403
        %v1417 = vld [vmem:[%s287] sm:$0xff]
        %v1418 = vld [vmem:[%s287 + $0x8] sm:$0xff]
        %s1419 = scalar_lea.vmem %s1, 256
        %v1420 = vld [vmem:[%s1419] sm:$0xff]
        %v1421 = vld [vmem:[%s1419 + $0x8] sm:$0xff]
        %v1422 = vld [vmem:[%s1419 + $0x10] sm:$0xff]
        %v1423 = vld [vmem:[%s1419 + $0x18] sm:$0xff]
        %1426 = vst [vmem:[#allocation1] ss:$2 sm:$0xff] %v1417
        %s1427 = scalar_lea.vmem [#allocation1], 16
        %1428 = vst [vmem:[%s1427] ss:$2 sm:$0xff] %v1418
        %v1429 = vld.sshfl [vmem:[#allocation1] sm:$0xff pattern:$0x75316420]
        %v1430 = vld.sshfl [vmem:[#allocation1 + $0x8] sm:$0xff pattern:$0x75316420]
        %v1431 = vld.sshfl [vmem:[#allocation1 + $0x10] sm:$0xff pattern:$0x75316420]
        %v1432 = vld.sshfl [vmem:[#allocation1 + $0x18] sm:$0xff pattern:$0x75316420]
        %1433 = vrot.lane.b32.xlu0 %v1429, 90
        %v1434 = vpop.permute.xlu0 %1433
        %1435 = vrot.lane.b32.xlu0 %v1430, 90
        %v1436 = vpop.permute.xlu0 %1435
        %1437 = vrot.lane.b32.xlu0 %v1431, 90
        %v1438 = vpop.permute.xlu0 %1437
        %1439 = vrot.lane.b32.xlu0 %v1432, 90
        %v1440 = vpop.permute.xlu0 %1439
        %vm1441 = vcmask 736256
        %v1442 = vsel %vm1441, %v1434, %v1436
        %v1443 = vsel %vm1441, %v1436, %v1438
        %v1444 = vsel %vm1441, %v1438, %v1440
        %v1446 = vsel %vm327, %v1420, 0
        %v1449 = vsel %vm327, %v1421, 0
        %v1452 = vsel %vm327, %v1422, 0
        %v1455 = vsel %vm327, %v1423, 0
        %v1457 = vsel %vm340, %v1442, 0
        %v1459 = vsel %vm340, %v1443, 0
        %v1461 = vsel %vm340, %v1444, 0
        %1463 = vmatpush.msra.mxu0 0.0
        %1464 = vmatpush.msra.mxu0 0.0
        %1465 = vmatpush.msra.mxu0 0.0
        %1466 = vmatpush.msra.mxu0 0.0
        %1467 = vmatpush.msra.mxu0 0.0
        %1468 = vmatpush.msra.mxu0 0.0
        %1469 = vmatpush.msra.mxu0 0.0
        %1470 = vmatpush.msra.mxu0 0.0
        %1471 = vmatpush.msra.mxu0 0.0
        %1472 = vmatpush.msra.mxu0 0.0
        %1473 = vmatpush.msra.mxu0 0.0
        %1474 = vmatpush.msra.mxu0 0.0
        %1475 = vmatpush.msra.mxu0 0.0
        %1476 = vmatpush.msra.mxu0 0.0
        %1477 = vmatpush.msra.mxu0 0.0
        %1478 = vmatpush.msra.mxu0 %v1457
        %1479 = vmatmul.f32.gmra.mxu0 %v1446
        %v1480 = vpop.f32.mrf.mxu0
        %v1481 = vadd.f32 0.0, %v1480
        %1482 = vmatmul.f32.gmra.mxu0 %v1449
        %v1483 = vpop.f32.mrf.mxu0
        %v1484 = vadd.f32 0.0, %v1483
        %1485 = vmatmul.f32.gmra.mxu0 %v1452
        %v1486 = vpop.f32.mrf.mxu0
        %v1487 = vadd.f32 0.0, %v1486
        %1488 = vmatmul.f32.gmra.mxu0 %v1455
        %v1489 = vpop.f32.mrf.mxu0
        %v1490 = vadd.f32 0.0, %v1489
        %1491 = vdwg.mxu0
        %1492 = vmatpush.msra.mxu0 0.0
        %1493 = vmatpush.msra.mxu0 0.0
        %1494 = vmatpush.msra.mxu0 0.0
        %1495 = vmatpush.msra.mxu0 0.0
        %1496 = vmatpush.msra.mxu0 0.0
        %1497 = vmatpush.msra.mxu0 0.0
        %1498 = vmatpush.msra.mxu0 0.0
        %1499 = vmatpush.msra.mxu0 0.0
        %1500 = vmatpush.msra.mxu0 0.0
        %1501 = vmatpush.msra.mxu0 0.0
        %1502 = vmatpush.msra.mxu0 0.0
        %1503 = vmatpush.msra.mxu0 0.0
        %1504 = vmatpush.msra.mxu0 0.0
        %1505 = vmatpush.msra.mxu0 0.0
        %1506 = vmatpush.msra.mxu0 0.0
        %1507 = vmatpush.msra.mxu0 %v1459
        %1508 = vmatmul.f32.gmra.mxu0 %v1446
        %v1509 = vpop.f32.mrf.mxu0
        %v1510 = vadd.f32 0.0, %v1509
        %1511 = vmatmul.f32.gmra.mxu0 %v1449
        %v1512 = vpop.f32.mrf.mxu0
        %v1513 = vadd.f32 0.0, %v1512
        %1514 = vmatmul.f32.gmra.mxu0 %v1452
        %v1515 = vpop.f32.mrf.mxu0
        %v1516 = vadd.f32 0.0, %v1515
        %1517 = vmatmul.f32.gmra.mxu0 %v1455
        %v1518 = vpop.f32.mrf.mxu0
        %v1519 = vadd.f32 0.0, %v1518
        %1520 = vdwg.mxu0
        %1521 = vmatpush.msra.mxu0 0.0
        %1522 = vmatpush.msra.mxu0 0.0
        %1523 = vmatpush.msra.mxu0 0.0
        %1524 = vmatpush.msra.mxu0 0.0
        %1525 = vmatpush.msra.mxu0 0.0
        %1526 = vmatpush.msra.mxu0 0.0
        %1527 = vmatpush.msra.mxu0 0.0
        %1528 = vmatpush.msra.mxu0 0.0
        %1529 = vmatpush.msra.mxu0 0.0
        %1530 = vmatpush.msra.mxu0 0.0
        %1531 = vmatpush.msra.mxu0 0.0
        %1532 = vmatpush.msra.mxu0 0.0
        %1533 = vmatpush.msra.mxu0 0.0
        %1534 = vmatpush.msra.mxu0 0.0
        %1535 = vmatpush.msra.mxu0 0.0
        %1536 = vmatpush.msra.mxu0 %v1461
        %1537 = vmatmul.f32.gmra.mxu0 %v1446
        %v1538 = vpop.f32.mrf.mxu0
        %v1539 = vadd.f32 0.0, %v1538
        %1540 = vmatmul.f32.gmra.mxu0 %v1449
        %v1541 = vpop.f32.mrf.mxu0
        %v1542 = vadd.f32 0.0, %v1541
        %1543 = vmatmul.f32.gmra.mxu0 %v1452
        %v1544 = vpop.f32.mrf.mxu0
        %v1545 = vadd.f32 0.0, %v1544
        %1546 = vmatmul.f32.gmra.mxu0 %v1455
        %v1547 = vpop.f32.mrf.mxu0
        %v1548 = vadd.f32 0.0, %v1547
        %1549 = vdwg.mxu0
        %v1550 = vadd.f32 %v1405, %v1481
        %v1551 = vadd.f32 %v1406, %v1510
        %v1552 = vadd.f32 %v1407, %v1539
        %v1553 = vadd.f32 %v1408, %v1484
        %v1554 = vadd.f32 %v1409, %v1513
        %v1555 = vadd.f32 %v1410, %v1542
        %v1556 = vadd.f32 %v1411, %v1487
        %v1557 = vadd.f32 %v1412, %v1516
        %v1558 = vadd.f32 %v1413, %v1545
        %v1559 = vadd.f32 %v1414, %v1490
        %v1560 = vadd.f32 %v1415, %v1519
        %v1561 = vadd.f32 %v1416, %v1548
        %v1562 = vld [vmem:[%s2] sm:$0xff]
        %v1563 = vld [vmem:[%s2 + $0x8] sm:$0xff]
        %v1564 = vld [vmem:[%s2 + $0x10] sm:$0xff]
        %v1565 = vld [vmem:[%s2 + $0x18] sm:$0xff]
        %1567 = vset.pattern.permute.xlu0 0
        %1568 = vperm.xlu0 %1567, %v1562
        %v1569 = vpop.permute.xlu0 %1568
        %1572 = vset.pattern.permute.xlu0 0
        %1573 = vperm.xlu0 %1572, %v1563
        %v1574 = vpop.permute.xlu0 %1573
        %1577 = vset.pattern.permute.xlu0 0
        %1578 = vperm.xlu0 %1577, %v1564
        %v1579 = vpop.permute.xlu0 %1578
        %1582 = vset.pattern.permute.xlu0 0
        %1583 = vperm.xlu0 %1582, %v1565
        %v1584 = vpop.permute.xlu0 %1583
        %v1586 = vadd.f32 %v1550, %v1569
        %v1587 = vadd.f32 %v1551, %v1569
        %v1588 = vadd.f32 %v1552, %v1569
        %v1589 = vadd.f32 %v1553, %v1574
        %v1590 = vadd.f32 %v1554, %v1574
        %v1591 = vadd.f32 %v1555, %v1574
        %v1592 = vadd.f32 %v1556, %v1579
        %v1593 = vadd.f32 %v1557, %v1579
        %v1594 = vadd.f32 %v1558, %v1579
        %v1595 = vadd.f32 %v1559, %v1584
        %v1596 = vadd.f32 %v1560, %v1584
        %v1597 = vadd.f32 %v1561, %v1584
        %v1598 = vmax.f32 %v1586, 0.0
        %v1599 = vmax.f32 %v1587, 0.0
        %v1600 = vmax.f32 %v1588, 0.0
        %v1601 = vmax.f32 %v1589, 0.0
        %v1602 = vmax.f32 %v1590, 0.0
        %v1603 = vmax.f32 %v1591, 0.0
        %v1604 = vmax.f32 %v1592, 0.0
        %v1605 = vmax.f32 %v1593, 0.0
        %v1606 = vmax.f32 %v1594, 0.0
        %v1607 = vmax.f32 %v1595, 0.0
        %v1608 = vmax.f32 %v1596, 0.0
        %v1609 = vmax.f32 %v1597, 0.0
        %v1610 = vld [vmem:[%s3] sm:$0xff]
        %v1611 = vld [vmem:[%s3 + $0x8] sm:$0xff]
        %v1612 = vld [vmem:[%s3 + $0x10] sm:$0x3]
        %v1613 = vld [vmem:[%s4] sm:$0xff]
        %v1614 = vld [vmem:[%s4 + $0x8] sm:$0xff]
        %v1615 = vld [vmem:[%s4 + $0x10] sm:$0x3]
        %1617 = vset.pattern.permute.xlu0 0
        %1618 = vperm.xlu0 %1617, %v1613
        %v1619 = vpop.permute.xlu0 %1618
        %1622 = vset.pattern.permute.xlu0 0
        %1623 = vperm.xlu0 %1622, %v1614
        %v1624 = vpop.permute.xlu0 %1623
        %1627 = vset.pattern.permute.xlu0 0
        %1628 = vperm.xlu0 %1627, %v1615
        %v1629 = vpop.permute.xlu0 %1628
        %vm1631 = vcmask 261120
        %v1633 = vsel %vm1631, %v1610, 0
        %v1636 = vsel %vm1631, %v1611, 0
        %v1639 = vsel %vm1631, %v1612, 0
        %1641 = vmatpush.msra.mxu0 0.0
        %1642 = vmatpush.msra.mxu0 0.0
        %1643 = vmatpush.msra.mxu0 0.0
        %1644 = vmatpush.msra.mxu0 0.0
        %1645 = vmatpush.msra.mxu0 0.0
        %1646 = vmatpush.msra.mxu0 0.0
        %1647 = vmatpush.msra.mxu0 0.0
        %1648 = vmatpush.msra.mxu0 0.0
        %1649 = vmatpush.msra.mxu0 0.0
        %1650 = vmatpush.msra.mxu0 0.0
        %1651 = vmatpush.msra.mxu0 0.0
        %1652 = vmatpush.msra.mxu0 0.0
        %1653 = vmatpush.msra.mxu0 %v1607
        %1654 = vmatpush.msra.mxu0 %v1604
        %1655 = vmatpush.msra.mxu0 %v1601
        %1656 = vmatpush.msra.mxu0 %v1598
        %1657 = vmatmul.f32.gmra.mxu0 %v1633
        %v1658 = vpop.f32.mrf.mxu0
        %v1659 = vadd.f32 %v1619, %v1658
        %1660 = vmatmul.f32.gmra.mxu0 %v1636
        %v1661 = vpop.f32.mrf.mxu0
        %v1662 = vadd.f32 %v1624, %v1661
        %1663 = vmatmul.f32.gmra.mxu0 %v1639
        %v1664 = vpop.f32.mrf.mxu0
        %v1665 = vadd.f32 %v1629, %v1664
        %1666 = vdwg.mxu0
        %1667 = vmatpush.msra.mxu0 0.0
        %1668 = vmatpush.msra.mxu0 0.0
        %1669 = vmatpush.msra.mxu0 0.0
        %1670 = vmatpush.msra.mxu0 0.0
        %1671 = vmatpush.msra.mxu0 0.0
        %1672 = vmatpush.msra.mxu0 0.0
        %1673 = vmatpush.msra.mxu0 0.0
        %1674 = vmatpush.msra.mxu0 0.0
        %1675 = vmatpush.msra.mxu0 0.0
        %1676 = vmatpush.msra.mxu0 0.0
        %1677 = vmatpush.msra.mxu0 0.0
        %1678 = vmatpush.msra.mxu0 0.0
        %1679 = vmatpush.msra.mxu0 %v1608
        %1680 = vmatpush.msra.mxu0 %v1605
        %1681 = vmatpush.msra.mxu0 %v1602
        %1682 = vmatpush.msra.mxu0 %v1599
        %1683 = vmatmul.f32.gmra.mxu0 %v1633
        %v1684 = vpop.f32.mrf.mxu0
        %v1685 = vadd.f32 %v1619, %v1684
        %1686 = vmatmul.f32.gmra.mxu0 %v1636
        %v1687 = vpop.f32.mrf.mxu0
        %v1688 = vadd.f32 %v1624, %v1687
        %1689 = vmatmul.f32.gmra.mxu0 %v1639
        %v1690 = vpop.f32.mrf.mxu0
        %v1691 = vadd.f32 %v1629, %v1690
        %1692 = vdwg.mxu0
        %1693 = vmatpush.msra.mxu0 0.0
        %1694 = vmatpush.msra.mxu0 0.0
        %1695 = vmatpush.msra.mxu0 0.0
        %1696 = vmatpush.msra.mxu0 0.0
        %1697 = vmatpush.msra.mxu0 0.0
        %1698 = vmatpush.msra.mxu0 0.0
        %1699 = vmatpush.msra.mxu0 0.0
        %1700 = vmatpush.msra.mxu0 0.0
        %1701 = vmatpush.msra.mxu0 0.0
        %1702 = vmatpush.msra.mxu0 0.0
        %1703 = vmatpush.msra.mxu0 0.0
        %1704 = vmatpush.msra.mxu0 0.0
        %1705 = vmatpush.msra.mxu0 %v1609
        %1706 = vmatpush.msra.mxu0 %v1606
        %1707 = vmatpush.msra.mxu0 %v1603
        %1708 = vmatpush.msra.mxu0 %v1600
        %1709 = vmatmul.f32.gmra.mxu0 %v1633
        %v1710 = vpop.f32.mrf.mxu0
        %v1711 = vadd.f32 %v1619, %v1710
        %1712 = vmatmul.f32.gmra.mxu0 %v1636
        %v1713 = vpop.f32.mrf.mxu0
        %v1714 = vadd.f32 %v1624, %v1713
        %1715 = vmatmul.f32.gmra.mxu0 %v1639
        %v1716 = vpop.f32.mrf.mxu0
        %v1717 = vadd.f32 %v1629, %v1716
        %1718 = vdwg.mxu0
        %v1719 = vmin.f32 %v1662, 4.1351666
        %v1720 = vmin.f32 %v1688, 4.1351666
        %v1721 = vmin.f32 %v1714, 4.1351666
        %v1722 = vmin.f32 %v1665, 4.1351666
        %v1723 = vmin.f32 %v1691, 4.1351666
        %v1724 = vmin.f32 %v1717, 4.1351666
        %v1728 = vrot.slane %v1659, 3
        %v1729 = vrot.slane %v1685, 3
        %v1730 = vrot.slane %v1711, 3
        %v1734 = vsub.f32 %v1659, %v1728
        %v1735 = vsub.f32 %v1685, %v1729
        %v1736 = vsub.f32 %v1711, %v1730
        %v1737 = vmul.f32 %v1734, 1.442695
        %v1738 = vpow.pop %v1737
        %v1739 = vmul.f32 %v1735, 1.442695
        %v1740 = vpow.pop %v1739
        %v1741 = vmul.f32 %v1736, 1.442695
        %v1742 = vpow.pop %v1741
        %v1743 = vadd.f32 %v1738, 1.0
        %v1744 = vadd.f32 %v1740, 1.0
        %v1745 = vadd.f32 %v1742, 1.0
        %v1746 = vrcp.pop %v1743
        %v1747 = vrcp.pop %v1744
        %v1748 = vrcp.pop %v1745
        %v1749 = vlaneseq
        %v1750 = vand.u32 %v1749, 127
        %v1751 = vadd.s32 %v1750, 128
        %v1752 = vadd.s32 %v1750, 256
        %v1753 = vcvt.s32.f32 %v1750
        %v1754 = vcvt.s32.f32 %v1751
        %v1755 = vcvt.s32.f32 %v1752
        %v1756 = vmul.f32 %v1753, 0.055555556
        %v1757 = vmul.f32 %v1754, 0.055555556
        %v1758 = vmul.f32 %v1755, 0.055555556
        %v1759 = vfloor.f32 %v1756
        %v1760 = vfloor.f32 %v1757
        %v1761 = vfloor.f32 %v1758
        %v1762 = vmul.f32 %v1759, 18.0
        %v1763 = vmul.f32 %v1760, 18.0
        %v1764 = vmul.f32 %v1761, 18.0
        %v1765 = vsub.f32 %v1753, %v1762
        %v1766 = vsub.f32 %v1754, %v1763
        %v1767 = vsub.f32 %v1755, %v1764
        %vm1768 = vcmp.ge.f32.partialorder %v1765, 18.0
        %vm1769 = vcmp.ge.f32.partialorder %v1766, 18.0
        %vm1770 = vcmp.ge.f32.partialorder %v1767, 18.0
        %v1771 = vadd.f32 %v1759, 1.0
        %v1772 = vadd.f32 %v1760, 1.0
        %v1773 = vadd.f32 %v1761, 1.0
        %vm1774 = vcmp.lt.f32.partialorder %v1765, 0.0
        %vm1775 = vcmp.lt.f32.partialorder %v1766, 0.0
        %vm1776 = vcmp.lt.f32.partialorder %v1767, 0.0
        %v1777 = vsub.f32 %v1759, 1.0
        %v1778 = vsub.f32 %v1760, 1.0
        %v1779 = vsub.f32 %v1761, 1.0
        %v1780 = vsel %vm1774, %v1777, %v1759
        %v1781 = vsel %vm1775, %v1778, %v1760
        %v1782 = vsel %vm1776, %v1779, %v1761
        %v1783 = vsel %vm1768, %v1771, %v1780
        %v1784 = vsel %vm1769, %v1772, %v1781
        %v1785 = vsel %vm1770, %v1773, %v1782
        %v1786 = vmul.f32 %v1783, 18.0
        %v1787 = vmul.f32 %v1784, 18.0
        %v1788 = vmul.f32 %v1785, 18.0
        %v1789 = vsub.f32 %v1753, %v1786
        %v1790 = vsub.f32 %v1754, %v1787
        %v1791 = vsub.f32 %v1755, %v1788
        %v1792 = vld [vmem:[%s5] sm:$0x7]
        %v1793 = vmul.f32 %v1789, 8.0
        %v1794 = vmul.f32 %v1790, 8.0
        %v1795 = vmul.f32 %v1791, 8.0
        %1797 = vset.pattern.permute.xlu0 0
        %1798 = vperm.xlu0 %1797, %v1792
        %v1799 = vpop.permute.xlu0 %1798
        %v1801 = vadd.f32 %v1799, %v1793
        %v1802 = vadd.f32 %v1799, %v1794
        %v1803 = vadd.f32 %v1799, %v1795
        %v1804 = vmul.f32 %v1783, 8.0
        %v1805 = vmul.f32 %v1784, 8.0
        %v1806 = vmul.f32 %v1785, 8.0
        %1807 = vset.pattern.permute.xlu0 1
        %1808 = vperm.xlu0 %1807, %v1792
        %v1809 = vpop.permute.xlu0 %1808
        %v1811 = vadd.f32 %v1809, %v1804
        %v1812 = vadd.f32 %v1809, %v1805
        %v1813 = vadd.f32 %v1809, %v1806
        %1814 = vset.pattern.permute.xlu0 2
        %1815 = vperm.xlu0 %1814, %v1792
        %v1816 = vpop.permute.xlu0 %1815
        %v1817 = vrot.slane %v1816, 2
        %v1819 = vmul.f32 %v1659, %v1817
        %v1820 = vmul.f32 %v1685, %v1817
        %v1821 = vmul.f32 %v1711, %v1817
        %v1822 = vmul.f32 %v1662, %v1817
        %v1823 = vmul.f32 %v1688, %v1817
        %v1824 = vmul.f32 %v1714, %v1817
        %v1828 = vrot.slane %v1801, 2
        %v1829 = vrot.slane %v1802, 2
        %v1830 = vrot.slane %v1803, 2
        %v1834 = vadd.f32 %v1819, %v1828
        %v1835 = vadd.f32 %v1820, %v1829
        %v1836 = vadd.f32 %v1821, %v1830
        %v1837 = vadd.f32 %v1822, %v1828
        %v1838 = vadd.f32 %v1823, %v1829
        %v1839 = vadd.f32 %v1824, %v1830
        %1840 = vset.pattern.permute.xlu0 3
        %1841 = vperm.xlu0 %1840, %v1792
        %v1842 = vpop.permute.xlu0 %1841
        %v1843 = vrot.slane %v1842, 7
        %v1845 = vmul.f32 %v1662, %v1843
        %v1846 = vmul.f32 %v1688, %v1843
        %v1847 = vmul.f32 %v1714, %v1843
        %v1851 = vrot.slane %v1811, 7
        %v1852 = vrot.slane %v1812, 7
        %v1853 = vrot.slane %v1813, 7
        %v1857 = vadd.f32 %v1845, %v1851
        %v1858 = vadd.f32 %v1846, %v1852
        %v1859 = vadd.f32 %v1847, %v1853
        %v1860 = vmul.f32 %v1719, 1.442695
        %v1861 = vpow.pop %v1860
        %v1862 = vmul.f32 %v1720, 1.442695
        %v1863 = vpow.pop %v1862
        %v1864 = vmul.f32 %v1721, 1.442695
        %v1865 = vpow.pop %v1864
        %v1866 = vrot.slane %v1816, 4
        %v1868 = vmul.f32 %v1861, %v1866
        %v1869 = vmul.f32 %v1863, %v1866
        %v1870 = vmul.f32 %v1865, %v1866
        %v1871 = vmul.f32 %v1722, 1.442695
        %v1872 = vpow.pop %v1871
        %v1873 = vmul.f32 %v1723, 1.442695
        %v1874 = vpow.pop %v1873
        %v1875 = vmul.f32 %v1724, 1.442695
        %v1876 = vpow.pop %v1875
        %v1877 = vrot.slane %v1842, 1
        %v1879 = vmul.f32 %v1861, %v1877
        %v1880 = vmul.f32 %v1863, %v1877
        %v1881 = vmul.f32 %v1865, %v1877
        %v1882 = vmul.f32 %v1872, %v1877
        %v1883 = vmul.f32 %v1874, %v1877
        %v1884 = vmul.f32 %v1876, %v1877
        %s1885 = smul.u32 %s19, 128
        %s1886 = sld [smem:[#allocation2 + %s1885]]
        %s1887 = sadd.s32 %s1885, 1
        %s1888 = sld [smem:[#allocation2 + %s1887]]
        %v1889 = vmul.f32 %v1868, 0.5
        %v1890 = vmul.f32 %v1869, 0.5
        %v1891 = vmul.f32 %v1870, 0.5
        %v1895 = vrot.slane %v1889, 6
        %v1896 = vrot.slane %v1890, 6
        %v1897 = vrot.slane %v1891, 6
        %v1901 = vsub.f32 %v1834, %v1895
        %v1902 = vsub.f32 %v1835, %v1896
        %v1903 = vsub.f32 %v1836, %v1897
        %v1904 = vsub.f32 %v1837, %v1895
        %v1905 = vsub.f32 %v1838, %v1896
        %v1906 = vsub.f32 %v1839, %v1897
        %s1907 = ssub.f32 %s1888, 1.0
        %v1908 = vmax.f32 %v1901, 0.0
        %v1909 = vmax.f32 %v1902, 0.0
        %v1910 = vmax.f32 %v1903, 0.0
        %v1911 = vmax.f32 %v1904, 0.0
        %v1912 = vmax.f32 %v1905, 0.0
        %v1913 = vmax.f32 %v1906, 0.0
        %v1914 = vstv %s1907
        %v1915 = vmin.f32 %v1914, %v1908
        %v1916 = vmin.f32 %v1914, %v1909
        %v1917 = vmin.f32 %v1914, %v1910
        %v1918 = vmin.f32 %v1914, %v1911
        %v1919 = vmin.f32 %v1914, %v1912
        %v1920 = vmin.f32 %v1914, %v1913
        %1927 = vst.sshfl [vmem:[#allocation1] sm:$0xff pattern:$0x75316420] %v1915
        %1928 = vst.sshfl [vmem:[#allocation1 + $0x8] sm:$0xff pattern:$0x75316420] %v1916
        %1929 = vst.sshfl [vmem:[#allocation1 + $0x10] sm:$0xff pattern:$0x75316420] %v1917
        %1930 = vst.sshfl [vmem:[#allocation1 + $0x20] sm:$0xff pattern:$0x75316420] %v1918
        %1931 = vst.sshfl [vmem:[#allocation1 + $0x28] sm:$0xff pattern:$0x75316420] %v1919
        %1932 = vst.sshfl [vmem:[#allocation1 + $0x30] sm:$0xff pattern:$0x75316420] %v1920
        %s1933 = scalar_lea.vmem [#allocation1], 1
        %v1934 = vld [vmem:[%s1933] ss:$2 sm:$0xff]
        %s1935 = scalar_lea.vmem [#allocation1], 17
        %v1936 = vld [vmem:[%s1935] ss:$2 sm:$0xff]
        %s1937 = scalar_lea.vmem [#allocation1], 32
        %v1938 = vld [vmem:[%s1937] ss:$2 sm:$0xff]
        %s1939 = scalar_lea.vmem [#allocation1], 48
        %v1940 = vld [vmem:[%s1939] ss:$2 sm:$0xff]
        %vm1941 = vcmask 1041408
        %vm1942 = vcmask 1045508
        %vm1943 = vmor %vm1941, %vm1942
        %v1944 = vrot.slane %v1934, 6
        %v1945 = vrot.slane %v1944, 4
        %v1946 = vrot.slane %v1938, 6
        %v1947 = vsel %vm1943, %v1945, %v1946
        %v1948 = vrot.slane %v1936, 6
        %v1949 = vrot.slane %v1948, 4
        %v1950 = vrot.slane %v1940, 6
        %v1951 = vsel %vm1943, %v1949, %v1950
        %1954 = vst [vmem:[%s292] sm:$0x77] %v1947
        %1955 = vst [vmem:[%s292 + $0x8] sm:$0x7] %v1951
        %v1956 = vmul.f32 %v1879, 0.5
        %v1957 = vmul.f32 %v1880, 0.5
        %v1958 = vmul.f32 %v1881, 0.5
        %v1959 = vmul.f32 %v1882, 0.5
        %v1960 = vmul.f32 %v1883, 0.5
        %v1961 = vmul.f32 %v1884, 0.5
        %v1968 = vrot.slane %v1956, 6
        %v1969 = vrot.slane %v1959, 6
        %v1970 = vsel %vm1941, %v1968, %v1969
        %v1971 = vrot.slane %v1957, 6
        %v1972 = vrot.slane %v1960, 6
        %v1973 = vsel %vm1941, %v1971, %v1972
        %v1974 = vrot.slane %v1958, 6
        %v1975 = vrot.slane %v1961, 6
        %v1976 = vsel %vm1941, %v1974, %v1975
        %v1980 = vsub.f32 %v1857, %v1970
        %v1981 = vsub.f32 %v1858, %v1973
        %v1982 = vsub.f32 %v1859, %v1976
        %s1983 = ssub.f32 %s1886, 1.0
        %v1984 = vmax.f32 %v1980, 0.0
        %v1985 = vmax.f32 %v1981, 0.0
        %v1986 = vmax.f32 %v1982, 0.0
        %v1987 = vstv %s1983
        %v1988 = vmin.f32 %v1987, %v1984
        %v1989 = vmin.f32 %v1987, %v1985
        %v1990 = vmin.f32 %v1987, %v1986
        %v1994 = vrot.slane %v1989, 4
        %v1995 = vsel %vm340, %v1988, %v1994
        %v1996 = vrot.slane %v1995, 5
        %v1997 = vrot.slane %v1996, 4
        %v1998 = vrot.slane %v1990, 5
        %v1999 = vrot.slane %v1998, 4
        %s2002 = scalar_lea.vmem %s292, 12
        %2003 = vst [vmem:[%s2002] sm:$0x77] %v1997
        %2004 = vst [vmem:[%s2002 + $0x8] sm:$0x7] %v1999
        %v2005 = vadd.f32 %v1834, %v1895
        %v2006 = vadd.f32 %v1835, %v1896
        %v2007 = vadd.f32 %v1836, %v1897
        %v2008 = vadd.f32 %v1837, %v1895
        %v2009 = vadd.f32 %v1838, %v1896
        %v2010 = vadd.f32 %v1839, %v1897
        %v2011 = vsub.f32 %v2005, 1.0
        %v2012 = vsub.f32 %v2006, 1.0
        %v2013 = vsub.f32 %v2007, 1.0
        %v2014 = vsub.f32 %v2008, 1.0
        %v2015 = vsub.f32 %v2009, 1.0
        %v2016 = vsub.f32 %v2010, 1.0
        %v2017 = vmax.f32 %v2011, 0.0
        %v2018 = vmax.f32 %v2012, 0.0
        %v2019 = vmax.f32 %v2013, 0.0
        %v2020 = vmax.f32 %v2014, 0.0
        %v2021 = vmax.f32 %v2015, 0.0
        %v2022 = vmax.f32 %v2016, 0.0
        %v2023 = vmin.f32 %v1914, %v2017
        %v2024 = vmin.f32 %v1914, %v2018
        %v2025 = vmin.f32 %v1914, %v2019
        %v2026 = vmin.f32 %v1914, %v2020
        %v2027 = vmin.f32 %v1914, %v2021
        %v2028 = vmin.f32 %v1914, %v2022
        %2035 = vst.sshfl [vmem:[#allocation1] sm:$0xff pattern:$0x75316420] %v2023
        %2036 = vst.sshfl [vmem:[#allocation1 + $0x8] sm:$0xff pattern:$0x75316420] %v2024
        %2037 = vst.sshfl [vmem:[#allocation1 + $0x10] sm:$0xff pattern:$0x75316420] %v2025
        %2038 = vst.sshfl [vmem:[#allocation1 + $0x20] sm:$0xff pattern:$0x75316420] %v2026
        %2039 = vst.sshfl [vmem:[#allocation1 + $0x28] sm:$0xff pattern:$0x75316420] %v2027
        %2040 = vst.sshfl [vmem:[#allocation1 + $0x30] sm:$0xff pattern:$0x75316420] %v2028
        %s2041 = scalar_lea.vmem [#allocation1], 1
        %v2042 = vld [vmem:[%s2041] ss:$2 sm:$0xff]
        %s2043 = scalar_lea.vmem [#allocation1], 17
        %v2044 = vld [vmem:[%s2043] ss:$2 sm:$0xff]
        %s2045 = scalar_lea.vmem [#allocation1], 32
        %v2046 = vld [vmem:[%s2045] ss:$2 sm:$0xff]
        %s2047 = scalar_lea.vmem [#allocation1], 48
        %v2048 = vld [vmem:[%s2047] ss:$2 sm:$0xff]
        %v2049 = vrot.slane %v2042, 6
        %v2050 = vrot.slane %v2049, 4
        %v2051 = vrot.slane %v2046, 6
        %v2052 = vsel %vm1943, %v2050, %v2051
        %v2053 = vrot.slane %v2044, 6
        %v2054 = vrot.slane %v2053, 4
        %v2055 = vrot.slane %v2048, 6
        %v2056 = vsel %vm1943, %v2054, %v2055
        %s2059 = scalar_lea.vmem %s292, 24
        %2060 = vst [vmem:[%s2059] sm:$0x77] %v2052
        %2061 = vst [vmem:[%s2059 + $0x8] sm:$0x7] %v2056
        %v2062 = vadd.f32 %v1857, %v1970
        %v2063 = vadd.f32 %v1858, %v1973
        %v2064 = vadd.f32 %v1859, %v1976
        %v2065 = vsub.f32 %v2062, 1.0
        %v2066 = vsub.f32 %v2063, 1.0
        %v2067 = vsub.f32 %v2064, 1.0
        %v2068 = vmax.f32 %v2065, 0.0
        %v2069 = vmax.f32 %v2066, 0.0
        %v2070 = vmax.f32 %v2067, 0.0
        %v2071 = vmin.f32 %v1987, %v2068
        %v2072 = vmin.f32 %v1987, %v2069
        %v2073 = vmin.f32 %v1987, %v2070
        %v2077 = vrot.slane %v2072, 4
        %v2078 = vsel %vm340, %v2071, %v2077
        %v2079 = vrot.slane %v2078, 5
        %v2080 = vrot.slane %v2079, 4
        %v2081 = vrot.slane %v2073, 5
        %v2082 = vrot.slane %v2081, 4
        %s2085 = scalar_lea.vmem %s292, 36
        %2086 = vst [vmem:[%s2085] sm:$0x77] %v2080
        %2087 = vst [vmem:[%s2085 + $0x8] sm:$0x7] %v2082
        %v2090 = vrot.slane %v1747, 4
        %v2091 = vsel %vm340, %v1746, %v2090
        %s2093 = scalar_lea.vmem %s292, 48
        %2094 = vst [vmem:[%s2093] sm:$0x77] %v2091
        %2095 = vst [vmem:[%s2093 + $0x8] sm:$0x7] %v1748
        %p2096 = scmp.lt.s32.totalorder %s19, 1
        %s2097 = scalar_select %p2096, %s19, 1
        %s2098 = smul.addr %s2097, 15
        %s2099 = smul.addr %s2098, 4
        %s2100 = scalar_lea.vmem %s7, %s2099
        // Predicated region
        $region53: #{tpu_custom_call.1} parent=47 // pred_check
          %p2101 = pneg %p189
        $region54: #{tpu_custom_call.1} parent=47 // pred_check_branch
          %2103 = sbr.rel (%p2101) target = $region56
        $region55: #{tpu_custom_call.1} parent=47 // pred_region
          _
        $region56: #{tpu_custom_call.1} parent=47 // pred_fallthru
          _
      $region48: #{tpu_custom_call.1} parent=5 // pred_fallthru
        _
      %p2104 = scmp.le.s32.totalorder 2, %s14
      // Predicated region
      $region57: #{tpu_custom_call.1} parent=5 // pred_check
        %p2105 = pneg %p2104
      $region58: #{tpu_custom_call.1} parent=5 // pred_check_branch
        %2107 = sbr.rel (%p2105) target = $region60
      $region59: #{tpu_custom_call.1} parent=5 // pred_region
        %s2108 = ssub.s32 %s14, 2
        // Predicated region
        $region61: #{tpu_custom_call.1} parent=59 // pred_check
          %p2109 = pneg %p195
        $region62: #{tpu_custom_call.1} parent=59 // pred_check_branch
          %2111 = sbr.rel (%p2109) target = $region64
        $region63: #{tpu_custom_call.1} parent=59 // pred_region
          %p2112 = scmp.lt.s32.totalorder %s20, 1
          %s2113 = scalar_select %p2112, %s20, 1
          %s2114 = smul.addr %s2113, 15
          %s2115 = smul.addr %s2114, 4
          %s2116 = scalar_lea.vmem %s7, %s2115
        $region64: #{tpu_custom_call.1} parent=59 // pred_fallthru
          _
      $region60: #{tpu_custom_call.1} parent=5 // pred_fallthru
        _
    $region6: #{tpu_custom_call.1} parent=1 // loop_footer
      %s18 = sadd.s32 1, %s14
    $region7: #{tpu_custom_call.1} parent=1 // loop_footer_branch
      %13 = sbr.rel target = $region3
    $region8: #{tpu_custom_call.1} parent=1 // loop_exit
      _
    %2117 = vsyncpa [#allocation3], 1
    %s2118 = scalar_lea.sflag [#allocation3], 1
    %2119 = vsyncpa %s2118, 1

</llo_original>
